<compile_context>
chip_gen: v7x
topology: tpu7x:2x2x1
jax: 0.10.0
libtpu: 0.0.40
codegen_flags: <defaults>
</compile_context>

<pallas_src>
import functools

import jax
import jax.numpy as jnp
from jax.experimental import pallas as pl
from jax.experimental.pallas import tpu as pltpu


_LANE = 128
# Sublane rows of patches per grid step -> up to 16*128 = 2048 patches/step.
# Per-step VMEM: 2 inputs * 2 buffers * (L * 16 * 128 * 4B) <= ~1.6 MiB even
# at L=25, comfortably inside v7x's 64 MiB / default scoped limits.
_MAX_TILE_ROWS = 16


# --------------------------------------------------------------------------
# Pallas kernel: one (batch b, patch-chunk k) tile of a single scale.
#   sr_ref / hr_ref : [L, TC, 128]  (L patch taps; patches lane-dense)
#   out_ref         : [1, 128]      per-batch loss (written at last chunk)
#   num_acc/den_acc : [TC, 128]     VMEM accumulators across the chunk axis
# --------------------------------------------------------------------------
def _scale_loss_kernel(sr_ref, hr_ref, out_ref, num_acc, den_acc, *, L, eps):
    k = pl.program_id(1)
    nk = pl.num_programs(1)

    @pl.when(k == 0)
    def _init():
        num_acc[...] = jnp.zeros_like(num_acc)
        den_acc[...] = jnp.zeros_like(den_acc)

    # ---- single unrolled pass over the L taps: pure VPU mul/add on [TC,128] ----
    s0 = sr_ref[0].astype(jnp.float32)
    h0 = hr_ref[0].astype(jnp.float32)
    ss = s0 * s0                      # sum_l sr^2
    sh = s0 * h0                      # sum_l sr*hr
    dd = jnp.zeros_like(h0)           # sum_l (hr - h0)^2   (centered moments)
    dsum = jnp.zeros_like(h0)         # sum_l (hr - h0)
    for l in range(1, L):
        s_l = sr_ref[l].astype(jnp.float32)
        h_l = hr_ref[l].astype(jnp.float32)
        d = h_l - h0
        ss = ss + s_l * s_l
        sh = sh + s_l * h_l
        dd = dd + d * d
        dsum = dsum + d

    # ||hr||^2 reconstructed from the centered moments (no second pass).
    hh = dd + h0 * (2.0 * dsum + float(L) * h0)

    # ---- cosine distance (matches F.normalize's max(norm, 1e-12) clamp) ----
    inv_s = jax.lax.rsqrt(jnp.maximum(ss, 1e-24))   # == 1 / max(||sr||, 1e-12)
    inv_h = jax.lax.rsqrt(jnp.maximum(hh, 1e-24))
    distance = 1.0 - sh * inv_s * inv_h             # [TC, 128]

    # ---- texture complexity:  sum (hr-mean)^2 = dd - dsum^2/L  (clamped) ----
    sq_dev = jnp.maximum(dd - dsum * dsum * (1.0 / float(L)), 0.0)
    complexity = jnp.sqrt(sq_dev * (1.0 / (float(L) - 1.0 + eps)))

    # ---- accumulate per-batch numerator / denominator lane-wise ----
    num_acc[...] += distance * complexity
    den_acc[...] += complexity

    # ---- finalize: attention normalization folded into a single division ----
    @pl.when(k == nk - 1)
    def _finalize():
        num = jnp.sum(num_acc[...])
        den = jnp.sum(den_acc[...])
        out_ref[...] = jnp.full((1, _LANE), num / (den + eps), dtype=jnp.float32)


def _scale_loss(sr_p: jnp.ndarray, hr_p: jnp.ndarray, tc: int, eps: float) -> jnp.ndarray:
    """sr_p / hr_p: [B, L, NC, 128] (zero-padded, patch index lane-dense)."""
    B, L, NC, _ = sr_p.shape
    nk = NC // tc
    out = pl.pallas_call(
        functools.partial(_scale_loss_kernel, L=L, eps=eps),
        out_shape=jax.ShapeDtypeStruct((B, 1, _LANE), jnp.float32),
        grid=(B, nk),
        in_specs=[
            pl.BlockSpec((None, L, tc, _LANE), lambda b, k: (b, 0, k, 0)),
            pl.BlockSpec((None, L, tc, _LANE), lambda b, k: (b, 0, k, 0)),
        ],
        out_specs=pl.BlockSpec((None, 1, _LANE), lambda b, k: (b, 0, 0)),
        scratch_shapes=[
            pltpu.VMEM((tc, _LANE), jnp.float32),
            pltpu.VMEM((tc, _LANE), jnp.float32),
        ],
        compiler_params=pltpu.CompilerParams(
            dimension_semantics=("parallel", "arbitrary")),
    )(sr_p, hr_p)
    return jnp.sum(out[:, 0, 0])


# --------------------------------------------------------------------------
# Glue: identity-kernel conv2d == strided patch extraction ("unfold"),
# built from strided slices (no gather), laid out L-major and lane-dense in N.
#   x: [B, H, W] plane  ->  ([B, L, NC_pad, 128], tc)
# patches_lmajor[b, l, n] == conv-unfold patches[b, n, l]  with
#   l = kh*p + kw,  n = oh*nw + ow.
# --------------------------------------------------------------------------
def _blocked_patches(x: jnp.ndarray, p: int, s: int, tile_rows: int = _MAX_TILE_ROWS):
    B, H, W = x.shape
    nh = (H - p) // s + 1
    nw = (W - p) // s + 1
    N = nh * nw
    slabs = []
    for kh in range(p):
        for kw in range(p):
            sl = jax.lax.slice(
                x,
                (0, kh, kw),
                (B, kh + (nh - 1) * s + 1, kw + (nw - 1) * s + 1),
                (1, s, s),
            )                              # [B, nh, nw]
            slabs.append(sl.reshape(B, N))
    pat = jnp.stack(slabs, axis=1)          # [B, L, N]

    nc = -(-N // _LANE)                     # ceil(N / 128)
    tc = min(tile_rows, nc)
    nc_pad = -(-nc // tc) * tc
    n_pad = nc_pad * _LANE
    if n_pad != N:
        # Zero patches contribute 0 to both numerator and denominator.
        pat = jnp.pad(pat, ((0, 0), (0, 0), (0, n_pad - N)))
    return pat.reshape(B, p * p, nc_pad, _LANE), tc


# --------------------------------------------------------------------------
# Full PatchLoss forward.
# --------------------------------------------------------------------------
def patch_loss(
    sr: jnp.ndarray,                         # [B, 3, H, W]
    hr: jnp.ndarray,                         # [B, 3, H, W]
    lr_features: jnp.ndarray | None = None,  # [B, 512, Hf, Wf]
    hr_features: jnp.ndarray | None = None,  # [B, 512, Hf, Wf]
    *,
    image_patch_sizes=(3, 5),
    feature_patch_sizes=(3,),
    eps: float = 1e-8,
    kappa: float = 1.0,
) -> jnp.ndarray:
    # RGB -> Y channel (elementwise glue; NCHW convention).
    sr_y = 16.0 + (65.481 * sr[:, 0] + 128.553 * sr[:, 1] + 24.966 * sr[:, 2]) / 255.0
    hr_y = 16.0 + (65.481 * hr[:, 0] + 128.553 * hr[:, 1] + 24.966 * hr[:, 2]) / 255.0

    image_loss = jnp.float32(0.0)
    for p in image_patch_sizes:
        s = p // 2 + 1                      # PatchKernel default stride
        sr_p, tc = _blocked_patches(sr_y, p, s)
        hr_p, _ = _blocked_patches(hr_y, p, s)
        image_loss = image_loss + _scale_loss(sr_p, hr_p, tc, eps)

    feature_loss = jnp.float32(0.0)
    if lr_features is not None and hr_features is not None:
        # PatchKernel weight is eye(P*P) repeated over in_channels, so the
        # conv sums over channels: equivalent to channel-sum then unfold.
        lr_sum = jnp.sum(lr_features, axis=1)
        hr_sum = jnp.sum(hr_features, axis=1)
        for p in feature_patch_sizes:
            s = p // 2 + 1
            lr_p, tc = _blocked_patches(lr_sum, p, s)
            hr_p, _ = _blocked_patches(hr_sum, p, s)
            feature_loss = feature_loss + _scale_loss(lr_p, hr_p, tc, eps)

    return image_loss + kappa * feature_loss


# --------------------------------------------------------------------------
# Pure-JAX reference (mirrors the PyTorch module) for a sanity check.
# --------------------------------------------------------------------------
def _unfold_ref(x, p, s):
    B, H, W = x.shape
    nh = (H - p) // s + 1
    nw = (W - p) // s + 1
    cols = []
    for kh in range(p):
        for kw in range(p):
            cols.append(x[:, kh:kh + (nh - 1) * s + 1:s,
                          kw:kw + (nw - 1) * s + 1:s].reshape(B, nh * nw))
    return jnp.stack(cols, axis=-1)          # [B, N, L]


def _scale_loss_ref(a, b, eps):
    an = a / jnp.maximum(jnp.linalg.norm(a, axis=-1, keepdims=True), 1e-12)
    bn = b / jnp.maximum(jnp.linalg.norm(b, axis=-1, keepdims=True), 1e-12)
    dist = 1.0 - jnp.sum(an * bn, axis=-1)
    L = a.shape[-1]
    mean = jnp.mean(b, axis=-1, keepdims=True)
    comp = jnp.sqrt(jnp.sum((b - mean) ** 2, axis=-1) / (L - 1.0 + eps))
    att = comp / (jnp.sum(comp, axis=-1, keepdims=True) + eps)
    return jnp.sum(dist * att)


def _patch_loss_ref(sr, hr, lr_f, hr_f, image_patch_sizes, feature_patch_sizes, eps, kappa):
    sr_y = 16.0 + (65.481 * sr[:, 0] + 128.553 * sr[:, 1] + 24.966 * sr[:, 2]) / 255.0
    hr_y = 16.0 + (65.481 * hr[:, 0] + 128.553 * hr[:, 1] + 24.966 * hr[:, 2]) / 255.0
    loss = jnp.float32(0.0)
    for p in image_patch_sizes:
        s = p // 2 + 1
        loss = loss + _scale_loss_ref(_unfold_ref(sr_y, p, s), _unfold_ref(hr_y, p, s), eps)
    if lr_f is not None and hr_f is not None:
        lr_sum = jnp.sum(lr_f, axis=1)
        hr_sum = jnp.sum(hr_f, axis=1)
        f = jnp.float32(0.0)
        for p in feature_patch_sizes:
            s = p // 2 + 1
            f = f + _scale_loss_ref(_unfold_ref(lr_sum, p, s), _unfold_ref(hr_sum, p, s), eps)
        loss = loss + kappa * f
    return loss


if __name__ == "__main__":
    key = jax.random.PRNGKey(0)
    k1, k2, k3, k4 = jax.random.split(key, 4)

    B, C, H, W = 2, 3, 16, 16
    FC, FH, FW = 512, 8, 8

    sr = jax.random.uniform(k1, (B, C, H, W), dtype=jnp.float32)
    hr = jax.random.uniform(k2, (B, C, H, W), dtype=jnp.float32)
    lr_features = jax.random.uniform(k3, (B, FC, FH, FW), dtype=jnp.float32)
    hr_features = jax.random.uniform(k4, (B, FC, FH, FW), dtype=jnp.float32)

    fn = jax.jit(functools.partial(
        patch_loss,
        image_patch_sizes=(3, 5), feature_patch_sizes=(3,),
        eps=1e-8, kappa=1.0))
    loss = fn(sr, hr, lr_features, hr_features)
    loss = jax.block_until_ready(loss)

    ref = _patch_loss_ref(sr, hr, lr_features, hr_features, (3, 5), (3,), 1e-8, 1.0)
    ref = float(jax.block_until_ready(ref))
    got = float(loss)
    assert abs(got - ref) <= 1e-4 + 2e-2 * abs(ref), (got, ref)

    print("KERNEL_OK")
</pallas_src>

<mosaic_0001>
module attributes {stable_mosaic.version = 11 : i64} {
  func.func @_scale_loss_kernel(%arg0: i32, %arg1: i32, %arg2: memref<1x9x1x128xf32, #tpu.memory_space<vmem>>, %arg3: memref<1x9x1x128xf32, #tpu.memory_space<vmem>>, %arg4: memref<1x1x128xf32, #tpu.memory_space<vmem>>, %arg5: memref<1x128xf32, #tpu.memory_space<vmem>>, %arg6: memref<1x128xf32, #tpu.memory_space<vmem>>) attributes {dimension_semantics = [#tpu.dimension_semantics<parallel>, #tpu.dimension_semantics<arbitrary>], iteration_bounds = array<i64: 2, 1>, scalar_prefetch = 0 : i64, scratch_operands = 2 : i64, tpu.core_type = #tpu.core_type<tc>, window_params = [{transform_indices = @transform_0, window_bounds = array<i64: 1, 9, 1, 128>}, {transform_indices = @transform_1, window_bounds = array<i64: 1, 9, 1, 128>}, {transform_indices = @transform_2, window_bounds = array<i64: 1, 1, 128>}]} {
    %c0_i32 = arith.constant 0 : i32
    %0 = arith.cmpi eq, %arg1, %c0_i32 : i32
    %1 = arith.extui %0 : i1 to i32
    %c0_i32_0 = arith.constant 0 : i32
    %2 = arith.cmpi ne, %1, %c0_i32_0 : i32
    scf.if %2 {
      %cst_83 = arith.constant 0.000000e+00 : f32
      %143 = vector.broadcast %cst_83 : f32 to vector<1x128xf32>
      %c0_84 = arith.constant 0 : index
      %c0_85 = arith.constant 0 : index
      %144 = vector.load %arg5[%c0_84, %c0_85] : memref<1x128xf32, #tpu.memory_space<vmem>>, vector<1x128xf32>
      tpu.vector_store %arg5[%c0_84, %c0_85], %143 {strides = array<i32>} : memref<1x128xf32, #tpu.memory_space<vmem>>, vector<1x128xf32>,
      %cst_86 = arith.constant 0.000000e+00 : f32
      %145 = vector.broadcast %cst_86 : f32 to vector<1x128xf32>
      %c0_87 = arith.constant 0 : index
      %c0_88 = arith.constant 0 : index
      %146 = vector.load %arg6[%c0_87, %c0_88] : memref<1x128xf32, #tpu.memory_space<vmem>>, vector<1x128xf32>
      tpu.vector_store %arg6[%c0_87, %c0_88], %145 {strides = array<i32>} : memref<1x128xf32, #tpu.memory_space<vmem>>, vector<1x128xf32>,
    } else {
    }
    %c0 = arith.constant 0 : index
    %c0_1 = arith.constant 0 : index
    %c0_2 = arith.constant 0 : index
    %c0_3 = arith.constant 0 : index
    %3 = vector.load %arg2[%c0, %c0_1, %c0_2, %c0_3] : memref<1x9x1x128xf32, #tpu.memory_space<vmem>>, vector<1x1x1x128xf32>
    %4 = vector.shape_cast %3 : vector<1x1x1x128xf32> to vector<1x128xf32>
    %c0_4 = arith.constant 0 : index
    %c0_5 = arith.constant 0 : index
    %c0_6 = arith.constant 0 : index
    %c0_7 = arith.constant 0 : index
    %5 = vector.load %arg3[%c0_4, %c0_5, %c0_6, %c0_7] : memref<1x9x1x128xf32, #tpu.memory_space<vmem>>, vector<1x1x1x128xf32>
    %6 = vector.shape_cast %5 : vector<1x1x1x128xf32> to vector<1x128xf32>
    %7 = arith.mulf %4, %4 : vector<1x128xf32>
    %8 = arith.mulf %4, %6 : vector<1x128xf32>
    %cst = arith.constant 0.000000e+00 : f32
    %9 = vector.broadcast %cst : f32 to vector<1x128xf32>
    %cst_8 = arith.constant 0.000000e+00 : f32
    %10 = vector.broadcast %cst_8 : f32 to vector<1x128xf32>
    %c0_9 = arith.constant 0 : index
    %c1 = arith.constant 1 : index
    %c0_10 = arith.constant 0 : index
    %c0_11 = arith.constant 0 : index
    %11 = vector.load %arg2[%c0_9, %c1, %c0_10, %c0_11] : memref<1x9x1x128xf32, #tpu.memory_space<vmem>>, vector<1x1x1x128xf32>
    %12 = vector.shape_cast %11 : vector<1x1x1x128xf32> to vector<1x128xf32>
    %c0_12 = arith.constant 0 : index
    %c1_13 = arith.constant 1 : index
    %c0_14 = arith.constant 0 : index
    %c0_15 = arith.constant 0 : index
    %13 = vector.load %arg3[%c0_12, %c1_13, %c0_14, %c0_15] : memref<1x9x1x128xf32, #tpu.memory_space<vmem>>, vector<1x1x1x128xf32>
    %14 = vector.shape_cast %13 : vector<1x1x1x128xf32> to vector<1x128xf32>
    %15 = arith.subf %14, %6 : vector<1x128xf32>
    %16 = arith.mulf %12, %12 : vector<1x128xf32>
    %17 = arith.addf %7, %16 : vector<1x128xf32>
    %18 = arith.mulf %12, %14 : vector<1x128xf32>
    %19 = arith.addf %8, %18 : vector<1x128xf32>
    %20 = arith.mulf %15, %15 : vector<1x128xf32>
    %21 = arith.addf %9, %20 : vector<1x128xf32>
    %22 = arith.addf %10, %15 : vector<1x128xf32>
    %c0_16 = arith.constant 0 : index
    %c2 = arith.constant 2 : index
    %c0_17 = arith.constant 0 : index
    %c0_18 = arith.constant 0 : index
    %23 = vector.load %arg2[%c0_16, %c2, %c0_17, %c0_18] : memref<1x9x1x128xf32, #tpu.memory_space<vmem>>, vector<1x1x1x128xf32>
    %24 = vector.shape_cast %23 : vector<1x1x1x128xf32> to vector<1x128xf32>
    %c0_19 = arith.constant 0 : index
    %c2_20 = arith.constant 2 : index
    %c0_21 = arith.constant 0 : index
    %c0_22 = arith.constant 0 : index
    %25 = vector.load %arg3[%c0_19, %c2_20, %c0_21, %c0_22] : memref<1x9x1x128xf32, #tpu.memory_space<vmem>>, vector<1x1x1x128xf32>
    %26 = vector.shape_cast %25 : vector<1x1x1x128xf32> to vector<1x128xf32>
    %27 = arith.subf %26, %6 : vector<1x128xf32>
    %28 = arith.mulf %24, %24 : vector<1x128xf32>
    %29 = arith.addf %17, %28 : vector<1x128xf32>
    %30 = arith.mulf %24, %26 : vector<1x128xf32>
    %31 = arith.addf %19, %30 : vector<1x128xf32>
    %32 = arith.mulf %27, %27 : vector<1x128xf32>
    %33 = arith.addf %21, %32 : vector<1x128xf32>
    %34 = arith.addf %22, %27 : vector<1x128xf32>
    %c0_23 = arith.constant 0 : index
    %c3 = arith.constant 3 : index
    %c0_24 = arith.constant 0 : index
    %c0_25 = arith.constant 0 : index
    %35 = vector.load %arg2[%c0_23, %c3, %c0_24, %c0_25] : memref<1x9x1x128xf32, #tpu.memory_space<vmem>>, vector<1x1x1x128xf32>
    %36 = vector.shape_cast %35 : vector<1x1x1x128xf32> to vector<1x128xf32>
    %c0_26 = arith.constant 0 : index
    %c3_27 = arith.constant 3 : index
    %c0_28 = arith.constant 0 : index
    %c0_29 = arith.constant 0 : index
    %37 = vector.load %arg3[%c0_26, %c3_27, %c0_28, %c0_29] : memref<1x9x1x128xf32, #tpu.memory_space<vmem>>, vector<1x1x1x128xf32>
    %38 = vector.shape_cast %37 : vector<1x1x1x128xf32> to vector<1x128xf32>
    %39 = arith.subf %38, %6 : vector<1x128xf32>
    %40 = arith.mulf %36, %36 : vector<1x128xf32>
    %41 = arith.addf %29, %40 : vector<1x128xf32>
    %42 = arith.mulf %36, %38 : vector<1x128xf32>
    %43 = arith.addf %31, %42 : vector<1x128xf32>
    %44 = arith.mulf %39, %39 : vector<1x128xf32>
    %45 = arith.addf %33, %44 : vector<1x128xf32>
    %46 = arith.addf %34, %39 : vector<1x128xf32>
    %c0_30 = arith.constant 0 : index
    %c4 = arith.constant 4 : index
    %c0_31 = arith.constant 0 : index
    %c0_32 = arith.constant 0 : index
    %47 = vector.load %arg2[%c0_30, %c4, %c0_31, %c0_32] : memref<1x9x1x128xf32, #tpu.memory_space<vmem>>, vector<1x1x1x128xf32>
    %48 = vector.shape_cast %47 : vector<1x1x1x128xf32> to vector<1x128xf32>
    %c0_33 = arith.constant 0 : index
    %c4_34 = arith.constant 4 : index
    %c0_35 = arith.constant 0 : index
    %c0_36 = arith.constant 0 : index
    %49 = vector.load %arg3[%c0_33, %c4_34, %c0_35, %c0_36] : memref<1x9x1x128xf32, #tpu.memory_space<vmem>>, vector<1x1x1x128xf32>
    %50 = vector.shape_cast %49 : vector<1x1x1x128xf32> to vector<1x128xf32>
    %51 = arith.subf %50, %6 : vector<1x128xf32>
    %52 = arith.mulf %48, %48 : vector<1x128xf32>
    %53 = arith.addf %41, %52 : vector<1x128xf32>
    %54 = arith.mulf %48, %50 : vector<1x128xf32>
    %55 = arith.addf %43, %54 : vector<1x128xf32>
    %56 = arith.mulf %51, %51 : vector<1x128xf32>
    %57 = arith.addf %45, %56 : vector<1x128xf32>
    %58 = arith.addf %46, %51 : vector<1x128xf32>
    %c0_37 = arith.constant 0 : index
    %c5 = arith.constant 5 : index
    %c0_38 = arith.constant 0 : index
    %c0_39 = arith.constant 0 : index
    %59 = vector.load %arg2[%c0_37, %c5, %c0_38, %c0_39] : memref<1x9x1x128xf32, #tpu.memory_space<vmem>>, vector<1x1x1x128xf32>
    %60 = vector.shape_cast %59 : vector<1x1x1x128xf32> to vector<1x128xf32>
    %c0_40 = arith.constant 0 : index
    %c5_41 = arith.constant 5 : index
    %c0_42 = arith.constant 0 : index
    %c0_43 = arith.constant 0 : index
    %61 = vector.load %arg3[%c0_40, %c5_41, %c0_42, %c0_43] : memref<1x9x1x128xf32, #tpu.memory_space<vmem>>, vector<1x1x1x128xf32>
    %62 = vector.shape_cast %61 : vector<1x1x1x128xf32> to vector<1x128xf32>
    %63 = arith.subf %62, %6 : vector<1x128xf32>
    %64 = arith.mulf %60, %60 : vector<1x128xf32>
    %65 = arith.addf %53, %64 : vector<1x128xf32>
    %66 = arith.mulf %60, %62 : vector<1x128xf32>
    %67 = arith.addf %55, %66 : vector<1x128xf32>
    %68 = arith.mulf %63, %63 : vector<1x128xf32>
    %69 = arith.addf %57, %68 : vector<1x128xf32>
    %70 = arith.addf %58, %63 : vector<1x128xf32>
    %c0_44 = arith.constant 0 : index
    %c6 = arith.constant 6 : index
    %c0_45 = arith.constant 0 : index
    %c0_46 = arith.constant 0 : index
    %71 = vector.load %arg2[%c0_44, %c6, %c0_45, %c0_46] : memref<1x9x1x128xf32, #tpu.memory_space<vmem>>, vector<1x1x1x128xf32>
    %72 = vector.shape_cast %71 : vector<1x1x1x128xf32> to vector<1x128xf32>
    %c0_47 = arith.constant 0 : index
    %c6_48 = arith.constant 6 : index
    %c0_49 = arith.constant 0 : index
    %c0_50 = arith.constant 0 : index
    %73 = vector.load %arg3[%c0_47, %c6_48, %c0_49, %c0_50] : memref<1x9x1x128xf32, #tpu.memory_space<vmem>>, vector<1x1x1x128xf32>
    %74 = vector.shape_cast %73 : vector<1x1x1x128xf32> to vector<1x128xf32>
    %75 = arith.subf %74, %6 : vector<1x128xf32>
    %76 = arith.mulf %72, %72 : vector<1x128xf32>
    %77 = arith.addf %65, %76 : vector<1x128xf32>
    %78 = arith.mulf %72, %74 : vector<1x128xf32>
    %79 = arith.addf %67, %78 : vector<1x128xf32>
    %80 = arith.mulf %75, %75 : vector<1x128xf32>
    %81 = arith.addf %69, %80 : vector<1x128xf32>
    %82 = arith.addf %70, %75 : vector<1x128xf32>
    %c0_51 = arith.constant 0 : index
    %c7 = arith.constant 7 : index
    %c0_52 = arith.constant 0 : index
    %c0_53 = arith.constant 0 : index
    %83 = vector.load %arg2[%c0_51, %c7, %c0_52, %c0_53] : memref<1x9x1x128xf32, #tpu.memory_space<vmem>>, vector<1x1x1x128xf32>
    %84 = vector.shape_cast %83 : vector<1x1x1x128xf32> to vector<1x128xf32>
    %c0_54 = arith.constant 0 : index
    %c7_55 = arith.constant 7 : index
    %c0_56 = arith.constant 0 : index
    %c0_57 = arith.constant 0 : index
    %85 = vector.load %arg3[%c0_54, %c7_55, %c0_56, %c0_57] : memref<1x9x1x128xf32, #tpu.memory_space<vmem>>, vector<1x1x1x128xf32>
    %86 = vector.shape_cast %85 : vector<1x1x1x128xf32> to vector<1x128xf32>
    %87 = arith.subf %86, %6 : vector<1x128xf32>
    %88 = arith.mulf %84, %84 : vector<1x128xf32>
    %89 = arith.addf %77, %88 : vector<1x128xf32>
    %90 = arith.mulf %84, %86 : vector<1x128xf32>
    %91 = arith.addf %79, %90 : vector<1x128xf32>
    %92 = arith.mulf %87, %87 : vector<1x128xf32>
    %93 = arith.addf %81, %92 : vector<1x128xf32>
    %94 = arith.addf %82, %87 : vector<1x128xf32>
    %c0_58 = arith.constant 0 : index
    %c8 = arith.constant 8 : index
    %c0_59 = arith.constant 0 : index
    %c0_60 = arith.constant 0 : index
    %95 = vector.load %arg2[%c0_58, %c8, %c0_59, %c0_60] : memref<1x9x1x128xf32, #tpu.memory_space<vmem>>, vector<1x1x1x128xf32>
    %96 = vector.shape_cast %95 : vector<1x1x1x128xf32> to vector<1x128xf32>
    %c0_61 = arith.constant 0 : index
    %c8_62 = arith.constant 8 : index
    %c0_63 = arith.constant 0 : index
    %c0_64 = arith.constant 0 : index
    %97 = vector.load %arg3[%c0_61, %c8_62, %c0_63, %c0_64] : memref<1x9x1x128xf32, #tpu.memory_space<vmem>>, vector<1x1x1x128xf32>
    %98 = vector.shape_cast %97 : vector<1x1x1x128xf32> to vector<1x128xf32>
    %99 = arith.subf %98, %6 : vector<1x128xf32>
    %100 = arith.mulf %96, %96 : vector<1x128xf32>
    %101 = arith.addf %89, %100 : vector<1x128xf32>
    %102 = arith.mulf %96, %98 : vector<1x128xf32>
    %103 = arith.addf %91, %102 : vector<1x128xf32>
    %104 = arith.mulf %99, %99 : vector<1x128xf32>
    %105 = arith.addf %93, %104 : vector<1x128xf32>
    %106 = arith.addf %94, %99 : vector<1x128xf32>
    %cst_65 = arith.constant 2.000000e+00 : f32
    %107 = vector.broadcast %cst_65 : f32 to vector<1x128xf32>
    %108 = arith.mulf %107, %106 : vector<1x128xf32>
    %cst_66 = arith.constant 9.000000e+00 : f32
    %109 = vector.broadcast %cst_66 : f32 to vector<1x128xf32>
    %110 = arith.mulf %109, %6 : vector<1x128xf32>
    %111 = arith.addf %108, %110 : vector<1x128xf32>
    %112 = arith.mulf %6, %111 : vector<1x128xf32>
    %113 = arith.addf %105, %112 : vector<1x128xf32>
    %cst_67 = arith.constant 1.000000e-24 : f32
    %114 = vector.broadcast %cst_67 : f32 to vector<1x128xf32>
    %115 = arith.maximumf %101, %114 : vector<1x128xf32>
    %116 = math.rsqrt %115 : vector<1x128xf32>
    %cst_68 = arith.constant 1.000000e-24 : f32
    %117 = vector.broadcast %cst_68 : f32 to vector<1x128xf32>
    %118 = arith.maximumf %113, %117 : vector<1x128xf32>
    %119 = math.rsqrt %118 : vector<1x128xf32>
    %120 = arith.mulf %103, %116 : vector<1x128xf32>
    %121 = arith.mulf %120, %119 : vector<1x128xf32>
    %cst_69 = arith.constant 1.000000e+00 : f32
    %122 = vector.broadcast %cst_69 : f32 to vector<1x128xf32>
    %123 = arith.subf %122, %121 : vector<1x128xf32>
    %124 = arith.mulf %106, %106 : vector<1x128xf32>
    %cst_70 = arith.constant 0.111111112 : f32
    %125 = vector.broadcast %cst_70 : f32 to vector<1x128xf32>
    %126 = arith.mulf %124, %125 : vector<1x128xf32>
    %127 = arith.subf %105, %126 : vector<1x128xf32>
    %cst_71 = arith.constant 0.000000e+00 : f32
    %128 = vector.broadcast %cst_71 : f32 to vector<1x128xf32>
    %129 = arith.maximumf %127, %128 : vector<1x128xf32>
    %cst_72 = arith.constant 1.250000e-01 : f32
    %130 = vector.broadcast %cst_72 : f32 to vector<1x128xf32>
    %131 = arith.mulf %129, %130 : vector<1x128xf32>
    %132 = math.sqrt %131 : vector<1x128xf32>
    %c0_73 = arith.constant 0 : index
    %c0_74 = arith.constant 0 : index
    %133 = vector.load %arg5[%c0_73, %c0_74] : memref<1x128xf32, #tpu.memory_space<vmem>>, vector<1x128xf32>
    %134 = arith.mulf %123, %132 : vector<1x128xf32>
    %135 = arith.addf %133, %134 : vector<1x128xf32>
    %c0_75 = arith.constant 0 : index
    %c0_76 = arith.constant 0 : index
    %136 = vector.load %arg5[%c0_75, %c0_76] : memref<1x128xf32, #tpu.memory_space<vmem>>, vector<1x128xf32>
    tpu.vector_store %arg5[%c0_75, %c0_76], %135 {strides = array<i32>} : memref<1x128xf32, #tpu.memory_space<vmem>>, vector<1x128xf32>,
    %c0_77 = arith.constant 0 : index
    %c0_78 = arith.constant 0 : index
    %137 = vector.load %arg6[%c0_77, %c0_78] : memref<1x128xf32, #tpu.memory_space<vmem>>, vector<1x128xf32>
    %138 = arith.addf %137, %132 : vector<1x128xf32>
    %c0_79 = arith.constant 0 : index
    %c0_80 = arith.constant 0 : index
    %139 = vector.load %arg6[%c0_79, %c0_80] : memref<1x128xf32, #tpu.memory_space<vmem>>, vector<1x128xf32>
    tpu.vector_store %arg6[%c0_79, %c0_80], %138 {strides = array<i32>} : memref<1x128xf32, #tpu.memory_space<vmem>>, vector<1x128xf32>,
    %c0_i32_81 = arith.constant 0 : i32
    %140 = arith.cmpi eq, %arg1, %c0_i32_81 : i32
    %141 = arith.extui %140 : i1 to i32
    %c0_i32_82 = arith.constant 0 : i32
    %142 = arith.cmpi ne, %141, %c0_i32_82 : i32
    scf.if %142 {
      %c0_83 = arith.constant 0 : index
      %c0_84 = arith.constant 0 : index
      %143 = vector.load %arg5[%c0_83, %c0_84] : memref<1x128xf32, #tpu.memory_space<vmem>>, vector<1x128xf32>
      %144 = vector.shape_cast %143 : vector<1x128xf32> to vector<1x1x128xf32>
      %cst_85 = arith.constant dense<0.000000e+00> : vector<1xf32>
      %145 = vector.multi_reduction <add>, %144, %cst_85 [1, 2] : vector<1x1x128xf32> to vector<1xf32>
      %146 = vector.shape_cast %145 : vector<1xf32> to vector<1x1x1xf32>
      %147 = vector.extract %146[0, 0, 0] : f32 from vector<1x1x1xf32>
      %c0_86 = arith.constant 0 : index
      %c0_87 = arith.constant 0 : index
      %148 = vector.load %arg6[%c0_86, %c0_87] : memref<1x128xf32, #tpu.memory_space<vmem>>, vector<1x128xf32>
      %149 = vector.shape_cast %148 : vector<1x128xf32> to vector<1x1x128xf32>
      %cst_88 = arith.constant dense<0.000000e+00> : vector<1xf32>
      %150 = vector.multi_reduction <add>, %149, %cst_88 [1, 2] : vector<1x1x128xf32> to vector<1xf32>
      %151 = vector.shape_cast %150 : vector<1xf32> to vector<1x1x1xf32>
      %152 = vector.extract %151[0, 0, 0] : f32 from vector<1x1x1xf32>
      %cst_89 = arith.constant 9.99999993E-9 : f32
      %153 = arith.addf %152, %cst_89 : f32
      %154 = arith.divf %147, %153 : f32
      %155 = vector.broadcast %154 : f32 to vector<1x128xf32>
      %c0_90 = arith.constant 0 : index
      %c0_91 = arith.constant 0 : index
      %c0_92 = arith.constant 0 : index
      %156 = vector.load %arg4[%c0_90, %c0_91, %c0_92] : memref<1x1x128xf32, #tpu.memory_space<vmem>>, vector<1x1x128xf32>
      %157 = vector.shape_cast %156 : vector<1x1x128xf32> to vector<1x128xf32>
      %158 = vector.shape_cast %155 : vector<1x128xf32> to vector<1x1x128xf32>
      tpu.vector_store %arg4[%c0_90, %c0_91, %c0_92], %158 {strides = array<i32>} : memref<1x1x128xf32, #tpu.memory_space<vmem>>, vector<1x1x128xf32>,
    } else {
    }
    return
  }
  func.func @transform_0(%arg0: i32, %arg1: i32) -> (i32, i32, i32, i32) {
    %c0_i32 = arith.constant 0 : i32
    %c0_i32_0 = arith.constant 0 : i32
    %c0_i32_1 = arith.constant 0 : i32
    return %arg0, %c0_i32, %arg1, %c0_i32_0 : i32, i32, i32, i32
  }
  func.func @transform_1(%arg0: i32, %arg1: i32) -> (i32, i32, i32, i32) {
    %c0_i32 = arith.constant 0 : i32
    %c0_i32_0 = arith.constant 0 : i32
    %c0_i32_1 = arith.constant 0 : i32
    return %arg0, %c0_i32, %arg1, %c0_i32_0 : i32, i32, i32, i32
  }
  func.func @transform_2(%arg0: i32, %arg1: i32) -> (i32, i32, i32) {
    %c0_i32 = arith.constant 0 : i32
    %c0_i32_0 = arith.constant 0 : i32
    %c0_i32_1 = arith.constant 0 : i32
    return %arg0, %c0_i32, %c0_i32_0 : i32, i32, i32
  }
}

module attributes {stable_mosaic.version = 11 : i64} {
  func.func @_scale_loss_kernel(%arg0: i32, %arg1: i32, %arg2: memref<1x25x1x128xf32, #tpu.memory_space<vmem>>, %arg3: memref<1x25x1x128xf32, #tpu.memory_space<vmem>>, %arg4: memref<1x1x128xf32, #tpu.memory_space<vmem>>, %arg5: memref<1x128xf32, #tpu.memory_space<vmem>>, %arg6: memref<1x128xf32, #tpu.memory_space<vmem>>) attributes {dimension_semantics = [#tpu.dimension_semantics<parallel>, #tpu.dimension_semantics<arbitrary>], iteration_bounds = array<i64: 2, 1>, scalar_prefetch = 0 : i64, scratch_operands = 2 : i64, tpu.core_type = #tpu.core_type<tc>, window_params = [{transform_indices = @transform_0, window_bounds = array<i64: 1, 25, 1, 128>}, {transform_indices = @transform_1, window_bounds = array<i64: 1, 25, 1, 128>}, {transform_indices = @transform_2, window_bounds = array<i64: 1, 1, 128>}]} {
    %c0_i32 = arith.constant 0 : i32
    %0 = arith.cmpi eq, %arg1, %c0_i32 : i32
    %1 = arith.extui %0 : i1 to i32
    %c0_i32_0 = arith.constant 0 : i32
    %2 = arith.cmpi ne, %1, %c0_i32_0 : i32
    scf.if %2 {
      %cst_195 = arith.constant 0.000000e+00 : f32
      %335 = vector.broadcast %cst_195 : f32 to vector<1x128xf32>
      %c0_196 = arith.constant 0 : index
      %c0_197 = arith.constant 0 : index
      %336 = vector.load %arg5[%c0_196, %c0_197] : memref<1x128xf32, #tpu.memory_space<vmem>>, vector<1x128xf32>
      tpu.vector_store %arg5[%c0_196, %c0_197], %335 {strides = array<i32>} : memref<1x128xf32, #tpu.memory_space<vmem>>, vector<1x128xf32>,
      %cst_198 = arith.constant 0.000000e+00 : f32
      %337 = vector.broadcast %cst_198 : f32 to vector<1x128xf32>
      %c0_199 = arith.constant 0 : index
      %c0_200 = arith.constant 0 : index
      %338 = vector.load %arg6[%c0_199, %c0_200] : memref<1x128xf32, #tpu.memory_space<vmem>>, vector<1x128xf32>
      tpu.vector_store %arg6[%c0_199, %c0_200], %337 {strides = array<i32>} : memref<1x128xf32, #tpu.memory_space<vmem>>, vector<1x128xf32>,
    } else {
    }
    %c0 = arith.constant 0 : index
    %c0_1 = arith.constant 0 : index
    %c0_2 = arith.constant 0 : index
    %c0_3 = arith.constant 0 : index
    %3 = vector.load %arg2[%c0, %c0_1, %c0_2, %c0_3] : memref<1x25x1x128xf32, #tpu.memory_space<vmem>>, vector<1x1x1x128xf32>
    %4 = vector.shape_cast %3 : vector<1x1x1x128xf32> to vector<1x128xf32>
    %c0_4 = arith.constant 0 : index
    %c0_5 = arith.constant 0 : index
    %c0_6 = arith.constant 0 : index
    %c0_7 = arith.constant 0 : index
    %5 = vector.load %arg3[%c0_4, %c0_5, %c0_6, %c0_7] : memref<1x25x1x128xf32, #tpu.memory_space<vmem>>, vector<1x1x1x128xf32>
    %6 = vector.shape_cast %5 : vector<1x1x1x128xf32> to vector<1x128xf32>
    %7 = arith.mulf %4, %4 : vector<1x128xf32>
    %8 = arith.mulf %4, %6 : vector<1x128xf32>
    %cst = arith.constant 0.000000e+00 : f32
    %9 = vector.broadcast %cst : f32 to vector<1x128xf32>
    %cst_8 = arith.constant 0.000000e+00 : f32
    %10 = vector.broadcast %cst_8 : f32 to vector<1x128xf32>
    %c0_9 = arith.constant 0 : index
    %c1 = arith.constant 1 : index
    %c0_10 = arith.constant 0 : index
    %c0_11 = arith.constant 0 : index
    %11 = vector.load %arg2[%c0_9, %c1, %c0_10, %c0_11] : memref<1x25x1x128xf32, #tpu.memory_space<vmem>>, vector<1x1x1x128xf32>
    %12 = vector.shape_cast %11 : vector<1x1x1x128xf32> to vector<1x128xf32>
    %c0_12 = arith.constant 0 : index
    %c1_13 = arith.constant 1 : index
    %c0_14 = arith.constant 0 : index
    %c0_15 = arith.constant 0 : index
    %13 = vector.load %arg3[%c0_12, %c1_13, %c0_14, %c0_15] : memref<1x25x1x128xf32, #tpu.memory_space<vmem>>, vector<1x1x1x128xf32>
    %14 = vector.shape_cast %13 : vector<1x1x1x128xf32> to vector<1x128xf32>
    %15 = arith.subf %14, %6 : vector<1x128xf32>
    %16 = arith.mulf %12, %12 : vector<1x128xf32>
    %17 = arith.addf %7, %16 : vector<1x128xf32>
    %18 = arith.mulf %12, %14 : vector<1x128xf32>
    %19 = arith.addf %8, %18 : vector<1x128xf32>
    %20 = arith.mulf %15, %15 : vector<1x128xf32>
    %21 = arith.addf %9, %20 : vector<1x128xf32>
    %22 = arith.addf %10, %15 : vector<1x128xf32>
    %c0_16 = arith.constant 0 : index
    %c2 = arith.constant 2 : index
    %c0_17 = arith.constant 0 : index
    %c0_18 = arith.constant 0 : index
    %23 = vector.load %arg2[%c0_16, %c2, %c0_17, %c0_18] : memref<1x25x1x128xf32, #tpu.memory_space<vmem>>, vector<1x1x1x128xf32>
    %24 = vector.shape_cast %23 : vector<1x1x1x128xf32> to vector<1x128xf32>
    %c0_19 = arith.constant 0 : index
    %c2_20 = arith.constant 2 : index
    %c0_21 = arith.constant 0 : index
    %c0_22 = arith.constant 0 : index
    %25 = vector.load %arg3[%c0_19, %c2_20, %c0_21, %c0_22] : memref<1x25x1x128xf32, #tpu.memory_space<vmem>>, vector<1x1x1x128xf32>
    %26 = vector.shape_cast %25 : vector<1x1x1x128xf32> to vector<1x128xf32>
    %27 = arith.subf %26, %6 : vector<1x128xf32>
    %28 = arith.mulf %24, %24 : vector<1x128xf32>
    %29 = arith.addf %17, %28 : vector<1x128xf32>
    %30 = arith.mulf %24, %26 : vector<1x128xf32>
    %31 = arith.addf %19, %30 : vector<1x128xf32>
    %32 = arith.mulf %27, %27 : vector<1x128xf32>
    %33 = arith.addf %21, %32 : vector<1x128xf32>
    %34 = arith.addf %22, %27 : vector<1x128xf32>
    %c0_23 = arith.constant 0 : index
    %c3 = arith.constant 3 : index
    %c0_24 = arith.constant 0 : index
    %c0_25 = arith.constant 0 : index
    %35 = vector.load %arg2[%c0_23, %c3, %c0_24, %c0_25] : memref<1x25x1x128xf32, #tpu.memory_space<vmem>>, vector<1x1x1x128xf32>
    %36 = vector.shape_cast %35 : vector<1x1x1x128xf32> to vector<1x128xf32>
    %c0_26 = arith.constant 0 : index
    %c3_27 = arith.constant 3 : index
    %c0_28 = arith.constant 0 : index
    %c0_29 = arith.constant 0 : index
    %37 = vector.load %arg3[%c0_26, %c3_27, %c0_28, %c0_29] : memref<1x25x1x128xf32, #tpu.memory_space<vmem>>, vector<1x1x1x128xf32>
    %38 = vector.shape_cast %37 : vector<1x1x1x128xf32> to vector<1x128xf32>
    %39 = arith.subf %38, %6 : vector<1x128xf32>
    %40 = arith.mulf %36, %36 : vector<1x128xf32>
    %41 = arith.addf %29, %40 : vector<1x128xf32>
    %42 = arith.mulf %36, %38 : vector<1x128xf32>
    %43 = arith.addf %31, %42 : vector<1x128xf32>
    %44 = arith.mulf %39, %39 : vector<1x128xf32>
    %45 = arith.addf %33, %44 : vector<1x128xf32>
    %46 = arith.addf %34, %39 : vector<1x128xf32>
    %c0_30 = arith.constant 0 : index
    %c4 = arith.constant 4 : index
    %c0_31 = arith.constant 0 : index
    %c0_32 = arith.constant 0 : index
    %47 = vector.load %arg2[%c0_30, %c4, %c0_31, %c0_32] : memref<1x25x1x128xf32, #tpu.memory_space<vmem>>, vector<1x1x1x128xf32>
    %48 = vector.shape_cast %47 : vector<1x1x1x128xf32> to vector<1x128xf32>
    %c0_33 = arith.constant 0 : index
    %c4_34 = arith.constant 4 : index
    %c0_35 = arith.constant 0 : index
    %c0_36 = arith.constant 0 : index
    %49 = vector.load %arg3[%c0_33, %c4_34, %c0_35, %c0_36] : memref<1x25x1x128xf32, #tpu.memory_space<vmem>>, vector<1x1x1x128xf32>
    %50 = vector.shape_cast %49 : vector<1x1x1x128xf32> to vector<1x128xf32>
    %51 = arith.subf %50, %6 : vector<1x128xf32>
    %52 = arith.mulf %48, %48 : vector<1x128xf32>
    %53 = arith.addf %41, %52 : vector<1x128xf32>
    %54 = arith.mulf %48, %50 : vector<1x128xf32>
    %55 = arith.addf %43, %54 : vector<1x128xf32>
    %56 = arith.mulf %51, %51 : vector<1x128xf32>
    %57 = arith.addf %45, %56 : vector<1x128xf32>
    %58 = arith.addf %46, %51 : vector<1x128xf32>
    %c0_37 = arith.constant 0 : index
    %c5 = arith.constant 5 : index
    %c0_38 = arith.constant 0 : index
    %c0_39 = arith.constant 0 : index
    %59 = vector.load %arg2[%c0_37, %c5, %c0_38, %c0_39] : memref<1x25x1x128xf32, #tpu.memory_space<vmem>>, vector<1x1x1x128xf32>
    %60 = vector.shape_cast %59 : vector<1x1x1x128xf32> to vector<1x128xf32>
    %c0_40 = arith.constant 0 : index
    %c5_41 = arith.constant 5 : index
    %c0_42 = arith.constant 0 : index
    %c0_43 = arith.constant 0 : index
    %61 = vector.load %arg3[%c0_40, %c5_41, %c0_42, %c0_43] : memref<1x25x1x128xf32, #tpu.memory_space<vmem>>, vector<1x1x1x128xf32>
    %62 = vector.shape_cast %61 : vector<1x1x1x128xf32> to vector<1x128xf32>
    %63 = arith.subf %62, %6 : vector<1x128xf32>
    %64 = arith.mulf %60, %60 : vector<1x128xf32>
    %65 = arith.addf %53, %64 : vector<1x128xf32>
    %66 = arith.mulf %60, %62 : vector<1x128xf32>
    %67 = arith.addf %55, %66 : vector<1x128xf32>
    %68 = arith.mulf %63, %63 : vector<1x128xf32>
    %69 = arith.addf %57, %68 : vector<1x128xf32>
    %70 = arith.addf %58, %63 : vector<1x128xf32>
    %c0_44 = arith.constant 0 : index
    %c6 = arith.constant 6 : index
    %c0_45 = arith.constant 0 : index
    %c0_46 = arith.constant 0 : index
    %71 = vector.load %arg2[%c0_44, %c6, %c0_45, %c0_46] : memref<1x25x1x128xf32, #tpu.memory_space<vmem>>, vector<1x1x1x128xf32>
    %72 = vector.shape_cast %71 : vector<1x1x1x128xf32> to vector<1x128xf32>
    %c0_47 = arith.constant 0 : index
    %c6_48 = arith.constant 6 : index
    %c0_49 = arith.constant 0 : index
    %c0_50 = arith.constant 0 : index
    %73 = vector.load %arg3[%c0_47, %c6_48, %c0_49, %c0_50] : memref<1x25x1x128xf32, #tpu.memory_space<vmem>>, vector<1x1x1x128xf32>
    %74 = vector.shape_cast %73 : vector<1x1x1x128xf32> to vector<1x128xf32>
    %75 = arith.subf %74, %6 : vector<1x128xf32>
    %76 = arith.mulf %72, %72 : vector<1x128xf32>
    %77 = arith.addf %65, %76 : vector<1x128xf32>
    %78 = arith.mulf %72, %74 : vector<1x128xf32>
    %79 = arith.addf %67, %78 : vector<1x128xf32>
    %80 = arith.mulf %75, %75 : vector<1x128xf32>
    %81 = arith.addf %69, %80 : vector<1x128xf32>
    %82 = arith.addf %70, %75 : vector<1x128xf32>
    %c0_51 = arith.constant 0 : index
    %c7 = arith.constant 7 : index
    %c0_52 = arith.constant 0 : index
    %c0_53 = arith.constant 0 : index
    %83 = vector.load %arg2[%c0_51, %c7, %c0_52, %c0_53] : memref<1x25x1x128xf32, #tpu.memory_space<vmem>>, vector<1x1x1x128xf32>
    %84 = vector.shape_cast %83 : vector<1x1x1x128xf32> to vector<1x128xf32>
    %c0_54 = arith.constant 0 : index
    %c7_55 = arith.constant 7 : index
    %c0_56 = arith.constant 0 : index
    %c0_57 = arith.constant 0 : index
    %85 = vector.load %arg3[%c0_54, %c7_55, %c0_56, %c0_57] : memref<1x25x1x128xf32, #tpu.memory_space<vmem>>, vector<1x1x1x128xf32>
    %86 = vector.shape_cast %85 : vector<1x1x1x128xf32> to vector<1x128xf32>
    %87 = arith.subf %86, %6 : vector<1x128xf32>
    %88 = arith.mulf %84, %84 : vector<1x128xf32>
    %89 = arith.addf %77, %88 : vector<1x128xf32>
    %90 = arith.mulf %84, %86 : vector<1x128xf32>
    %91 = arith.addf %79, %90 : vector<1x128xf32>
    %92 = arith.mulf %87, %87 : vector<1x128xf32>
    %93 = arith.addf %81, %92 : vector<1x128xf32>
    %94 = arith.addf %82, %87 : vector<1x128xf32>
    %c0_58 = arith.constant 0 : index
    %c8 = arith.constant 8 : index
    %c0_59 = arith.constant 0 : index
    %c0_60 = arith.constant 0 : index
    %95 = vector.load %arg2[%c0_58, %c8, %c0_59, %c0_60] : memref<1x25x1x128xf32, #tpu.memory_space<vmem>>, vector<1x1x1x128xf32>
    %96 = vector.shape_cast %95 : vector<1x1x1x128xf32> to vector<1x128xf32>
    %c0_61 = arith.constant 0 : index
    %c8_62 = arith.constant 8 : index
    %c0_63 = arith.constant 0 : index
    %c0_64 = arith.constant 0 : index
    %97 = vector.load %arg3[%c0_61, %c8_62, %c0_63, %c0_64] : memref<1x25x1x128xf32, #tpu.memory_space<vmem>>, vector<1x1x1x128xf32>
    %98 = vector.shape_cast %97 : vector<1x1x1x128xf32> to vector<1x128xf32>
    %99 = arith.subf %98, %6 : vector<1x128xf32>
    %100 = arith.mulf %96, %96 : vector<1x128xf32>
    %101 = arith.addf %89, %100 : vector<1x128xf32>
    %102 = arith.mulf %96, %98 : vector<1x128xf32>
    %103 = arith.addf %91, %102 : vector<1x128xf32>
    %104 = arith.mulf %99, %99 : vector<1x128xf32>
    %105 = arith.addf %93, %104 : vector<1x128xf32>
    %106 = arith.addf %94, %99 : vector<1x128xf32>
    %c0_65 = arith.constant 0 : index
    %c9 = arith.constant 9 : index
    %c0_66 = arith.constant 0 : index
    %c0_67 = arith.constant 0 : index
    %107 = vector.load %arg2[%c0_65, %c9, %c0_66, %c0_67] : memref<1x25x1x128xf32, #tpu.memory_space<vmem>>, vector<1x1x1x128xf32>
    %108 = vector.shape_cast %107 : vector<1x1x1x128xf32> to vector<1x128xf32>
    %c0_68 = arith.constant 0 : index
    %c9_69 = arith.constant 9 : index
    %c0_70 = arith.constant 0 : index
    %c0_71 = arith.constant 0 : index
    %109 = vector.load %arg3[%c0_68, %c9_69, %c0_70, %c0_71] : memref<1x25x1x128xf32, #tpu.memory_space<vmem>>, vector<1x1x1x128xf32>
    %110 = vector.shape_cast %109 : vector<1x1x1x128xf32> to vector<1x128xf32>
    %111 = arith.subf %110, %6 : vector<1x128xf32>
    %112 = arith.mulf %108, %108 : vector<1x128xf32>
    %113 = arith.addf %101, %112 : vector<1x128xf32>
    %114 = arith.mulf %108, %110 : vector<1x128xf32>
    %115 = arith.addf %103, %114 : vector<1x128xf32>
    %116 = arith.mulf %111, %111 : vector<1x128xf32>
    %117 = arith.addf %105, %116 : vector<1x128xf32>
    %118 = arith.addf %106, %111 : vector<1x128xf32>
    %c0_72 = arith.constant 0 : index
    %c10 = arith.constant 10 : index
    %c0_73 = arith.constant 0 : index
    %c0_74 = arith.constant 0 : index
    %119 = vector.load %arg2[%c0_72, %c10, %c0_73, %c0_74] : memref<1x25x1x128xf32, #tpu.memory_space<vmem>>, vector<1x1x1x128xf32>
    %120 = vector.shape_cast %119 : vector<1x1x1x128xf32> to vector<1x128xf32>
    %c0_75 = arith.constant 0 : index
    %c10_76 = arith.constant 10 : index
    %c0_77 = arith.constant 0 : index
    %c0_78 = arith.constant 0 : index
    %121 = vector.load %arg3[%c0_75, %c10_76, %c0_77, %c0_78] : memref<1x25x1x128xf32, #tpu.memory_space<vmem>>, vector<1x1x1x128xf32>
    %122 = vector.shape_cast %121 : vector<1x1x1x128xf32> to vector<1x128xf32>
    %123 = arith.subf %122, %6 : vector<1x128xf32>
    %124 = arith.mulf %120, %120 : vector<1x128xf32>
    %125 = arith.addf %113, %124 : vector<1x128xf32>
    %126 = arith.mulf %120, %122 : vector<1x128xf32>
    %127 = arith.addf %115, %126 : vector<1x128xf32>
    %128 = arith.mulf %123, %123 : vector<1x128xf32>
    %129 = arith.addf %117, %128 : vector<1x128xf32>
    %130 = arith.addf %118, %123 : vector<1x128xf32>
    %c0_79 = arith.constant 0 : index
    %c11 = arith.constant 11 : index
    %c0_80 = arith.constant 0 : index
    %c0_81 = arith.constant 0 : index
    %131 = vector.load %arg2[%c0_79, %c11, %c0_80, %c0_81] : memref<1x25x1x128xf32, #tpu.memory_space<vmem>>, vector<1x1x1x128xf32>
    %132 = vector.shape_cast %131 : vector<1x1x1x128xf32> to vector<1x128xf32>
    %c0_82 = arith.constant 0 : index
    %c11_83 = arith.constant 11 : index
    %c0_84 = arith.constant 0 : index
    %c0_85 = arith.constant 0 : index
    %133 = vector.load %arg3[%c0_82, %c11_83, %c0_84, %c0_85] : memref<1x25x1x128xf32, #tpu.memory_space<vmem>>, vector<1x1x1x128xf32>
    %134 = vector.shape_cast %133 : vector<1x1x1x128xf32> to vector<1x128xf32>
    %135 = arith.subf %134, %6 : vector<1x128xf32>
    %136 = arith.mulf %132, %132 : vector<1x128xf32>
    %137 = arith.addf %125, %136 : vector<1x128xf32>
    %138 = arith.mulf %132, %134 : vector<1x128xf32>
    %139 = arith.addf %127, %138 : vector<1x128xf32>
    %140 = arith.mulf %135, %135 : vector<1x128xf32>
    %141 = arith.addf %129, %140 : vector<1x128xf32>
    %142 = arith.addf %130, %135 : vector<1x128xf32>
    %c0_86 = arith.constant 0 : index
    %c12 = arith.constant 12 : index
    %c0_87 = arith.constant 0 : index
    %c0_88 = arith.constant 0 : index
    %143 = vector.load %arg2[%c0_86, %c12, %c0_87, %c0_88] : memref<1x25x1x128xf32, #tpu.memory_space<vmem>>, vector<1x1x1x128xf32>
    %144 = vector.shape_cast %143 : vector<1x1x1x128xf32> to vector<1x128xf32>
    %c0_89 = arith.constant 0 : index
    %c12_90 = arith.constant 12 : index
    %c0_91 = arith.constant 0 : index
    %c0_92 = arith.constant 0 : index
    %145 = vector.load %arg3[%c0_89, %c12_90, %c0_91, %c0_92] : memref<1x25x1x128xf32, #tpu.memory_space<vmem>>, vector<1x1x1x128xf32>
    %146 = vector.shape_cast %145 : vector<1x1x1x128xf32> to vector<1x128xf32>
    %147 = arith.subf %146, %6 : vector<1x128xf32>
    %148 = arith.mulf %144, %144 : vector<1x128xf32>
    %149 = arith.addf %137, %148 : vector<1x128xf32>
    %150 = arith.mulf %144, %146 : vector<1x128xf32>
    %151 = arith.addf %139, %150 : vector<1x128xf32>
    %152 = arith.mulf %147, %147 : vector<1x128xf32>
    %153 = arith.addf %141, %152 : vector<1x128xf32>
    %154 = arith.addf %142, %147 : vector<1x128xf32>
    %c0_93 = arith.constant 0 : index
    %c13 = arith.constant 13 : index
    %c0_94 = arith.constant 0 : index
    %c0_95 = arith.constant 0 : index
    %155 = vector.load %arg2[%c0_93, %c13, %c0_94, %c0_95] : memref<1x25x1x128xf32, #tpu.memory_space<vmem>>, vector<1x1x1x128xf32>
    %156 = vector.shape_cast %155 : vector<1x1x1x128xf32> to vector<1x128xf32>
    %c0_96 = arith.constant 0 : index
    %c13_97 = arith.constant 13 : index
    %c0_98 = arith.constant 0 : index
    %c0_99 = arith.constant 0 : index
    %157 = vector.load %arg3[%c0_96, %c13_97, %c0_98, %c0_99] : memref<1x25x1x128xf32, #tpu.memory_space<vmem>>, vector<1x1x1x128xf32>
    %158 = vector.shape_cast %157 : vector<1x1x1x128xf32> to vector<1x128xf32>
    %159 = arith.subf %158, %6 : vector<1x128xf32>
    %160 = arith.mulf %156, %156 : vector<1x128xf32>
    %161 = arith.addf %149, %160 : vector<1x128xf32>
    %162 = arith.mulf %156, %158 : vector<1x128xf32>
    %163 = arith.addf %151, %162 : vector<1x128xf32>
    %164 = arith.mulf %159, %159 : vector<1x128xf32>
    %165 = arith.addf %153, %164 : vector<1x128xf32>
    %166 = arith.addf %154, %159 : vector<1x128xf32>
    %c0_100 = arith.constant 0 : index
    %c14 = arith.constant 14 : index
    %c0_101 = arith.constant 0 : index
    %c0_102 = arith.constant 0 : index
    %167 = vector.load %arg2[%c0_100, %c14, %c0_101, %c0_102] : memref<1x25x1x128xf32, #tpu.memory_space<vmem>>, vector<1x1x1x128xf32>
    %168 = vector.shape_cast %167 : vector<1x1x1x128xf32> to vector<1x128xf32>
    %c0_103 = arith.constant 0 : index
    %c14_104 = arith.constant 14 : index
    %c0_105 = arith.constant 0 : index
    %c0_106 = arith.constant 0 : index
    %169 = vector.load %arg3[%c0_103, %c14_104, %c0_105, %c0_106] : memref<1x25x1x128xf32, #tpu.memory_space<vmem>>, vector<1x1x1x128xf32>
    %170 = vector.shape_cast %169 : vector<1x1x1x128xf32> to vector<1x128xf32>
    %171 = arith.subf %170, %6 : vector<1x128xf32>
    %172 = arith.mulf %168, %168 : vector<1x128xf32>
    %173 = arith.addf %161, %172 : vector<1x128xf32>
    %174 = arith.mulf %168, %170 : vector<1x128xf32>
    %175 = arith.addf %163, %174 : vector<1x128xf32>
    %176 = arith.mulf %171, %171 : vector<1x128xf32>
    %177 = arith.addf %165, %176 : vector<1x128xf32>
    %178 = arith.addf %166, %171 : vector<1x128xf32>
    %c0_107 = arith.constant 0 : index
    %c15 = arith.constant 15 : index
    %c0_108 = arith.constant 0 : index
    %c0_109 = arith.constant 0 : index
    %179 = vector.load %arg2[%c0_107, %c15, %c0_108, %c0_109] : memref<1x25x1x128xf32, #tpu.memory_space<vmem>>, vector<1x1x1x128xf32>
    %180 = vector.shape_cast %179 : vector<1x1x1x128xf32> to vector<1x128xf32>
    %c0_110 = arith.constant 0 : index
    %c15_111 = arith.constant 15 : index
    %c0_112 = arith.constant 0 : index
    %c0_113 = arith.constant 0 : index
    %181 = vector.load %arg3[%c0_110, %c15_111, %c0_112, %c0_113] : memref<1x25x1x128xf32, #tpu.memory_space<vmem>>, vector<1x1x1x128xf32>
    %182 = vector.shape_cast %181 : vector<1x1x1x128xf32> to vector<1x128xf32>
    %183 = arith.subf %182, %6 : vector<1x128xf32>
    %184 = arith.mulf %180, %180 : vector<1x128xf32>
    %185 = arith.addf %173, %184 : vector<1x128xf32>
    %186 = arith.mulf %180, %182 : vector<1x128xf32>
    %187 = arith.addf %175, %186 : vector<1x128xf32>
    %188 = arith.mulf %183, %183 : vector<1x128xf32>
    %189 = arith.addf %177, %188 : vector<1x128xf32>
    %190 = arith.addf %178, %183 : vector<1x128xf32>
    %c0_114 = arith.constant 0 : index
    %c16 = arith.constant 16 : index
    %c0_115 = arith.constant 0 : index
    %c0_116 = arith.constant 0 : index
    %191 = vector.load %arg2[%c0_114, %c16, %c0_115, %c0_116] : memref<1x25x1x128xf32, #tpu.memory_space<vmem>>, vector<1x1x1x128xf32>
    %192 = vector.shape_cast %191 : vector<1x1x1x128xf32> to vector<1x128xf32>
    %c0_117 = arith.constant 0 : index
    %c16_118 = arith.constant 16 : index
    %c0_119 = arith.constant 0 : index
    %c0_120 = arith.constant 0 : index
    %193 = vector.load %arg3[%c0_117, %c16_118, %c0_119, %c0_120] : memref<1x25x1x128xf32, #tpu.memory_space<vmem>>, vector<1x1x1x128xf32>
    %194 = vector.shape_cast %193 : vector<1x1x1x128xf32> to vector<1x128xf32>
    %195 = arith.subf %194, %6 : vector<1x128xf32>
    %196 = arith.mulf %192, %192 : vector<1x128xf32>
    %197 = arith.addf %185, %196 : vector<1x128xf32>
    %198 = arith.mulf %192, %194 : vector<1x128xf32>
    %199 = arith.addf %187, %198 : vector<1x128xf32>
    %200 = arith.mulf %195, %195 : vector<1x128xf32>
    %201 = arith.addf %189, %200 : vector<1x128xf32>
    %202 = arith.addf %190, %195 : vector<1x128xf32>
    %c0_121 = arith.constant 0 : index
    %c17 = arith.constant 17 : index
    %c0_122 = arith.constant 0 : index
    %c0_123 = arith.constant 0 : index
    %203 = vector.load %arg2[%c0_121, %c17, %c0_122, %c0_123] : memref<1x25x1x128xf32, #tpu.memory_space<vmem>>, vector<1x1x1x128xf32>
    %204 = vector.shape_cast %203 : vector<1x1x1x128xf32> to vector<1x128xf32>
    %c0_124 = arith.constant 0 : index
    %c17_125 = arith.constant 17 : index
    %c0_126 = arith.constant 0 : index
    %c0_127 = arith.constant 0 : index
    %205 = vector.load %arg3[%c0_124, %c17_125, %c0_126, %c0_127] : memref<1x25x1x128xf32, #tpu.memory_space<vmem>>, vector<1x1x1x128xf32>
    %206 = vector.shape_cast %205 : vector<1x1x1x128xf32> to vector<1x128xf32>
    %207 = arith.subf %206, %6 : vector<1x128xf32>
    %208 = arith.mulf %204, %204 : vector<1x128xf32>
    %209 = arith.addf %197, %208 : vector<1x128xf32>
    %210 = arith.mulf %204, %206 : vector<1x128xf32>
    %211 = arith.addf %199, %210 : vector<1x128xf32>
    %212 = arith.mulf %207, %207 : vector<1x128xf32>
    %213 = arith.addf %201, %212 : vector<1x128xf32>
    %214 = arith.addf %202, %207 : vector<1x128xf32>
    %c0_128 = arith.constant 0 : index
    %c18 = arith.constant 18 : index
    %c0_129 = arith.constant 0 : index
    %c0_130 = arith.constant 0 : index
    %215 = vector.load %arg2[%c0_128, %c18, %c0_129, %c0_130] : memref<1x25x1x128xf32, #tpu.memory_space<vmem>>, vector<1x1x1x128xf32>
    %216 = vector.shape_cast %215 : vector<1x1x1x128xf32> to vector<1x128xf32>
    %c0_131 = arith.constant 0 : index
    %c18_132 = arith.constant 18 : index
    %c0_133 = arith.constant 0 : index
    %c0_134 = arith.constant 0 : index
    %217 = vector.load %arg3[%c0_131, %c18_132, %c0_133, %c0_134] : memref<1x25x1x128xf32, #tpu.memory_space<vmem>>, vector<1x1x1x128xf32>
    %218 = vector.shape_cast %217 : vector<1x1x1x128xf32> to vector<1x128xf32>
    %219 = arith.subf %218, %6 : vector<1x128xf32>
    %220 = arith.mulf %216, %216 : vector<1x128xf32>
    %221 = arith.addf %209, %220 : vector<1x128xf32>
    %222 = arith.mulf %216, %218 : vector<1x128xf32>
    %223 = arith.addf %211, %222 : vector<1x128xf32>
    %224 = arith.mulf %219, %219 : vector<1x128xf32>
    %225 = arith.addf %213, %224 : vector<1x128xf32>
    %226 = arith.addf %214, %219 : vector<1x128xf32>
    %c0_135 = arith.constant 0 : index
    %c19 = arith.constant 19 : index
    %c0_136 = arith.constant 0 : index
    %c0_137 = arith.constant 0 : index
    %227 = vector.load %arg2[%c0_135, %c19, %c0_136, %c0_137] : memref<1x25x1x128xf32, #tpu.memory_space<vmem>>, vector<1x1x1x128xf32>
    %228 = vector.shape_cast %227 : vector<1x1x1x128xf32> to vector<1x128xf32>
    %c0_138 = arith.constant 0 : index
    %c19_139 = arith.constant 19 : index
    %c0_140 = arith.constant 0 : index
    %c0_141 = arith.constant 0 : index
    %229 = vector.load %arg3[%c0_138, %c19_139, %c0_140, %c0_141] : memref<1x25x1x128xf32, #tpu.memory_space<vmem>>, vector<1x1x1x128xf32>
    %230 = vector.shape_cast %229 : vector<1x1x1x128xf32> to vector<1x128xf32>
    %231 = arith.subf %230, %6 : vector<1x128xf32>
    %232 = arith.mulf %228, %228 : vector<1x128xf32>
    %233 = arith.addf %221, %232 : vector<1x128xf32>
    %234 = arith.mulf %228, %230 : vector<1x128xf32>
    %235 = arith.addf %223, %234 : vector<1x128xf32>
    %236 = arith.mulf %231, %231 : vector<1x128xf32>
    %237 = arith.addf %225, %236 : vector<1x128xf32>
    %238 = arith.addf %226, %231 : vector<1x128xf32>
    %c0_142 = arith.constant 0 : index
    %c20 = arith.constant 20 : index
    %c0_143 = arith.constant 0 : index
    %c0_144 = arith.constant 0 : index
    %239 = vector.load %arg2[%c0_142, %c20, %c0_143, %c0_144] : memref<1x25x1x128xf32, #tpu.memory_space<vmem>>, vector<1x1x1x128xf32>
    %240 = vector.shape_cast %239 : vector<1x1x1x128xf32> to vector<1x128xf32>
    %c0_145 = arith.constant 0 : index
    %c20_146 = arith.constant 20 : index
    %c0_147 = arith.constant 0 : index
    %c0_148 = arith.constant 0 : index
    %241 = vector.load %arg3[%c0_145, %c20_146, %c0_147, %c0_148] : memref<1x25x1x128xf32, #tpu.memory_space<vmem>>, vector<1x1x1x128xf32>
    %242 = vector.shape_cast %241 : vector<1x1x1x128xf32> to vector<1x128xf32>
    %243 = arith.subf %242, %6 : vector<1x128xf32>
    %244 = arith.mulf %240, %240 : vector<1x128xf32>
    %245 = arith.addf %233, %244 : vector<1x128xf32>
    %246 = arith.mulf %240, %242 : vector<1x128xf32>
    %247 = arith.addf %235, %246 : vector<1x128xf32>
    %248 = arith.mulf %243, %243 : vector<1x128xf32>
    %249 = arith.addf %237, %248 : vector<1x128xf32>
    %250 = arith.addf %238, %243 : vector<1x128xf32>
    %c0_149 = arith.constant 0 : index
    %c21 = arith.constant 21 : index
    %c0_150 = arith.constant 0 : index
    %c0_151 = arith.constant 0 : index
    %251 = vector.load %arg2[%c0_149, %c21, %c0_150, %c0_151] : memref<1x25x1x128xf32, #tpu.memory_space<vmem>>, vector<1x1x1x128xf32>
    %252 = vector.shape_cast %251 : vector<1x1x1x128xf32> to vector<1x128xf32>
    %c0_152 = arith.constant 0 : index
    %c21_153 = arith.constant 21 : index
    %c0_154 = arith.constant 0 : index
    %c0_155 = arith.constant 0 : index
    %253 = vector.load %arg3[%c0_152, %c21_153, %c0_154, %c0_155] : memref<1x25x1x128xf32, #tpu.memory_space<vmem>>, vector<1x1x1x128xf32>
    %254 = vector.shape_cast %253 : vector<1x1x1x128xf32> to vector<1x128xf32>
    %255 = arith.subf %254, %6 : vector<1x128xf32>
    %256 = arith.mulf %252, %252 : vector<1x128xf32>
    %257 = arith.addf %245, %256 : vector<1x128xf32>
    %258 = arith.mulf %252, %254 : vector<1x128xf32>
    %259 = arith.addf %247, %258 : vector<1x128xf32>
    %260 = arith.mulf %255, %255 : vector<1x128xf32>
    %261 = arith.addf %249, %260 : vector<1x128xf32>
    %262 = arith.addf %250, %255 : vector<1x128xf32>
    %c0_156 = arith.constant 0 : index
    %c22 = arith.constant 22 : index
    %c0_157 = arith.constant 0 : index
    %c0_158 = arith.constant 0 : index
    %263 = vector.load %arg2[%c0_156, %c22, %c0_157, %c0_158] : memref<1x25x1x128xf32, #tpu.memory_space<vmem>>, vector<1x1x1x128xf32>
    %264 = vector.shape_cast %263 : vector<1x1x1x128xf32> to vector<1x128xf32>
    %c0_159 = arith.constant 0 : index
    %c22_160 = arith.constant 22 : index
    %c0_161 = arith.constant 0 : index
    %c0_162 = arith.constant 0 : index
    %265 = vector.load %arg3[%c0_159, %c22_160, %c0_161, %c0_162] : memref<1x25x1x128xf32, #tpu.memory_space<vmem>>, vector<1x1x1x128xf32>
    %266 = vector.shape_cast %265 : vector<1x1x1x128xf32> to vector<1x128xf32>
    %267 = arith.subf %266, %6 : vector<1x128xf32>
    %268 = arith.mulf %264, %264 : vector<1x128xf32>
    %269 = arith.addf %257, %268 : vector<1x128xf32>
    %270 = arith.mulf %264, %266 : vector<1x128xf32>
    %271 = arith.addf %259, %270 : vector<1x128xf32>
    %272 = arith.mulf %267, %267 : vector<1x128xf32>
    %273 = arith.addf %261, %272 : vector<1x128xf32>
    %274 = arith.addf %262, %267 : vector<1x128xf32>
    %c0_163 = arith.constant 0 : index
    %c23 = arith.constant 23 : index
    %c0_164 = arith.constant 0 : index
    %c0_165 = arith.constant 0 : index
    %275 = vector.load %arg2[%c0_163, %c23, %c0_164, %c0_165] : memref<1x25x1x128xf32, #tpu.memory_space<vmem>>, vector<1x1x1x128xf32>
    %276 = vector.shape_cast %275 : vector<1x1x1x128xf32> to vector<1x128xf32>
    %c0_166 = arith.constant 0 : index
    %c23_167 = arith.constant 23 : index
    %c0_168 = arith.constant 0 : index
    %c0_169 = arith.constant 0 : index
    %277 = vector.load %arg3[%c0_166, %c23_167, %c0_168, %c0_169] : memref<1x25x1x128xf32, #tpu.memory_space<vmem>>, vector<1x1x1x128xf32>
    %278 = vector.shape_cast %277 : vector<1x1x1x128xf32> to vector<1x128xf32>
    %279 = arith.subf %278, %6 : vector<1x128xf32>
    %280 = arith.mulf %276, %276 : vector<1x128xf32>
    %281 = arith.addf %269, %280 : vector<1x128xf32>
    %282 = arith.mulf %276, %278 : vector<1x128xf32>
    %283 = arith.addf %271, %282 : vector<1x128xf32>
    %284 = arith.mulf %279, %279 : vector<1x128xf32>
    %285 = arith.addf %273, %284 : vector<1x128xf32>
    %286 = arith.addf %274, %279 : vector<1x128xf32>
    %c0_170 = arith.constant 0 : index
    %c24 = arith.constant 24 : index
    %c0_171 = arith.constant 0 : index
    %c0_172 = arith.constant 0 : index
    %287 = vector.load %arg2[%c0_170, %c24, %c0_171, %c0_172] : memref<1x25x1x128xf32, #tpu.memory_space<vmem>>, vector<1x1x1x128xf32>
    %288 = vector.shape_cast %287 : vector<1x1x1x128xf32> to vector<1x128xf32>
    %c0_173 = arith.constant 0 : index
    %c24_174 = arith.constant 24 : index
    %c0_175 = arith.constant 0 : index
    %c0_176 = arith.constant 0 : index
    %289 = vector.load %arg3[%c0_173, %c24_174, %c0_175, %c0_176] : memref<1x25x1x128xf32, #tpu.memory_space<vmem>>, vector<1x1x1x128xf32>
    %290 = vector.shape_cast %289 : vector<1x1x1x128xf32> to vector<1x128xf32>
    %291 = arith.subf %290, %6 : vector<1x128xf32>
    %292 = arith.mulf %288, %288 : vector<1x128xf32>
    %293 = arith.addf %281, %292 : vector<1x128xf32>
    %294 = arith.mulf %288, %290 : vector<1x128xf32>
    %295 = arith.addf %283, %294 : vector<1x128xf32>
    %296 = arith.mulf %291, %291 : vector<1x128xf32>
    %297 = arith.addf %285, %296 : vector<1x128xf32>
    %298 = arith.addf %286, %291 : vector<1x128xf32>
    %cst_177 = arith.constant 2.000000e+00 : f32
    %299 = vector.broadcast %cst_177 : f32 to vector<1x128xf32>
    %300 = arith.mulf %299, %298 : vector<1x128xf32>
    %cst_178 = arith.constant 2.500000e+01 : f32
    %301 = vector.broadcast %cst_178 : f32 to vector<1x128xf32>
    %302 = arith.mulf %301, %6 : vector<1x128xf32>
    %303 = arith.addf %300, %302 : vector<1x128xf32>
    %304 = arith.mulf %6, %303 : vector<1x128xf32>
    %305 = arith.addf %297, %304 : vector<1x128xf32>
    %cst_179 = arith.constant 1.000000e-24 : f32
    %306 = vector.broadcast %cst_179 : f32 to vector<1x128xf32>
    %307 = arith.maximumf %293, %306 : vector<1x128xf32>
    %308 = math.rsqrt %307 : vector<1x128xf32>
    %cst_180 = arith.constant 1.000000e-24 : f32
    %309 = vector.broadcast %cst_180 : f32 to vector<1x128xf32>
    %310 = arith.maximumf %305, %309 : vector<1x128xf32>
    %311 = math.rsqrt %310 : vector<1x128xf32>
    %312 = arith.mulf %295, %308 : vector<1x128xf32>
    %313 = arith.mulf %312, %311 : vector<1x128xf32>
    %cst_181 = arith.constant 1.000000e+00 : f32
    %314 = vector.broadcast %cst_181 : f32 to vector<1x128xf32>
    %315 = arith.subf %314, %313 : vector<1x128xf32>
    %316 = arith.mulf %298, %298 : vector<1x128xf32>
    %cst_182 = arith.constant 4.000000e-02 : f32
    %317 = vector.broadcast %cst_182 : f32 to vector<1x128xf32>
    %318 = arith.mulf %316, %317 : vector<1x128xf32>
    %319 = arith.subf %297, %318 : vector<1x128xf32>
    %cst_183 = arith.constant 0.000000e+00 : f32
    %320 = vector.broadcast %cst_183 : f32 to vector<1x128xf32>
    %321 = arith.maximumf %319, %320 : vector<1x128xf32>
    %cst_184 = arith.constant 0.0416666679 : f32
    %322 = vector.broadcast %cst_184 : f32 to vector<1x128xf32>
    %323 = arith.mulf %321, %322 : vector<1x128xf32>
    %324 = math.sqrt %323 : vector<1x128xf32>
    %c0_185 = arith.constant 0 : index
    %c0_186 = arith.constant 0 : index
    %325 = vector.load %arg5[%c0_185, %c0_186] : memref<1x128xf32, #tpu.memory_space<vmem>>, vector<1x128xf32>
    %326 = arith.mulf %315, %324 : vector<1x128xf32>
    %327 = arith.addf %325, %326 : vector<1x128xf32>
    %c0_187 = arith.constant 0 : index
    %c0_188 = arith.constant 0 : index
    %328 = vector.load %arg5[%c0_187, %c0_188] : memref<1x128xf32, #tpu.memory_space<vmem>>, vector<1x128xf32>
    tpu.vector_store %arg5[%c0_187, %c0_188], %327 {strides = array<i32>} : memref<1x128xf32, #tpu.memory_space<vmem>>, vector<1x128xf32>,
    %c0_189 = arith.constant 0 : index
    %c0_190 = arith.constant 0 : index
    %329 = vector.load %arg6[%c0_189, %c0_190] : memref<1x128xf32, #tpu.memory_space<vmem>>, vector<1x128xf32>
    %330 = arith.addf %329, %324 : vector<1x128xf32>
    %c0_191 = arith.constant 0 : index
    %c0_192 = arith.constant 0 : index
    %331 = vector.load %arg6[%c0_191, %c0_192] : memref<1x128xf32, #tpu.memory_space<vmem>>, vector<1x128xf32>
    tpu.vector_store %arg6[%c0_191, %c0_192], %330 {strides = array<i32>} : memref<1x128xf32, #tpu.memory_space<vmem>>, vector<1x128xf32>,
    %c0_i32_193 = arith.constant 0 : i32
    %332 = arith.cmpi eq, %arg1, %c0_i32_193 : i32
    %333 = arith.extui %332 : i1 to i32
    %c0_i32_194 = arith.constant 0 : i32
    %334 = arith.cmpi ne, %333, %c0_i32_194 : i32
    scf.if %334 {
      %c0_195 = arith.constant 0 : index
      %c0_196 = arith.constant 0 : index
      %335 = vector.load %arg5[%c0_195, %c0_196] : memref<1x128xf32, #tpu.memory_space<vmem>>, vector<1x128xf32>
      %336 = vector.shape_cast %335 : vector<1x128xf32> to vector<1x1x128xf32>
      %cst_197 = arith.constant dense<0.000000e+00> : vector<1xf32>
      %337 = vector.multi_reduction <add>, %336, %cst_197 [1, 2] : vector<1x1x128xf32> to vector<1xf32>
      %338 = vector.shape_cast %337 : vector<1xf32> to vector<1x1x1xf32>
      %339 = vector.extract %338[0, 0, 0] : f32 from vector<1x1x1xf32>
      %c0_198 = arith.constant 0 : index
      %c0_199 = arith.constant 0 : index
      %340 = vector.load %arg6[%c0_198, %c0_199] : memref<1x128xf32, #tpu.memory_space<vmem>>, vector<1x128xf32>
      %341 = vector.shape_cast %340 : vector<1x128xf32> to vector<1x1x128xf32>
      %cst_200 = arith.constant dense<0.000000e+00> : vector<1xf32>
      %342 = vector.multi_reduction <add>, %341, %cst_200 [1, 2] : vector<1x1x128xf32> to vector<1xf32>
      %343 = vector.shape_cast %342 : vector<1xf32> to vector<1x1x1xf32>
      %344 = vector.extract %343[0, 0, 0] : f32 from vector<1x1x1xf32>
      %cst_201 = arith.constant 9.99999993E-9 : f32
      %345 = arith.addf %344, %cst_201 : f32
      %346 = arith.divf %339, %345 : f32
      %347 = vector.broadcast %346 : f32 to vector<1x128xf32>
      %c0_202 = arith.constant 0 : index
      %c0_203 = arith.constant 0 : index
      %c0_204 = arith.constant 0 : index
      %348 = vector.load %arg4[%c0_202, %c0_203, %c0_204] : memref<1x1x128xf32, #tpu.memory_space<vmem>>, vector<1x1x128xf32>
      %349 = vector.shape_cast %348 : vector<1x1x128xf32> to vector<1x128xf32>
      %350 = vector.shape_cast %347 : vector<1x128xf32> to vector<1x1x128xf32>
      tpu.vector_store %arg4[%c0_202, %c0_203, %c0_204], %350 {strides = array<i32>} : memref<1x1x128xf32, #tpu.memory_space<vmem>>, vector<1x1x128xf32>,
    } else {
    }
    return
  }
  func.func @transform_0(%arg0: i32, %arg1: i32) -> (i32, i32, i32, i32) {
    %c0_i32 = arith.constant 0 : i32
    %c0_i32_0 = arith.constant 0 : i32
    %c0_i32_1 = arith.constant 0 : i32
    return %arg0, %c0_i32, %arg1, %c0_i32_0 : i32, i32, i32, i32
  }
  func.func @transform_1(%arg0: i32, %arg1: i32) -> (i32, i32, i32, i32) {
    %c0_i32 = arith.constant 0 : i32
    %c0_i32_0 = arith.constant 0 : i32
    %c0_i32_1 = arith.constant 0 : i32
    return %arg0, %c0_i32, %arg1, %c0_i32_0 : i32, i32, i32, i32
  }
  func.func @transform_2(%arg0: i32, %arg1: i32) -> (i32, i32, i32) {
    %c0_i32 = arith.constant 0 : i32
    %c0_i32_0 = arith.constant 0 : i32
    %c0_i32_1 = arith.constant 0 : i32
    return %arg0, %c0_i32, %c0_i32_0 : i32, i32, i32
  }
}

</mosaic_0001>

<llo_original>
// kernel: patch_loss.5
$region0: #{patch_loss.5}
  #allocation0 [shape = 'u32[]', space=smem, size = 0x4, offset = 0x4, fixed_abs, tag = 'smem constant byte address 0x4 - core index']
  #allocation1 [shape = 'u32[144,128]{1,0:T(1,128)}', space=vmem, size = 0x12000, scoped, tag = 'internal scratch']
  #allocation2 [shape = 'f32[1,128]{1,0:T(1,128)}', space=vmem, size = 0x200, scoped, tag = 'scratch operand']
  #allocation3 [shape = 'f32[1,128]{1,0:T(1,128)}', space=vmem, size = 0x200, scoped, tag = 'scratch operand']
  %s0 = inlined_call_operand.vmem [shape: f32[2,9,1,128], index: 0, kind: input, shape index: {}]
  %s1 = inlined_call_operand.vmem [shape: f32[2,9,1,128], index: 1, kind: input, shape index: {}]
  %s2 = inlined_call_operand.vmem [shape: f32[2,1,128], index: 2, kind: output, shape index: {}]
  %s3 = sld [smem:[#allocation0]]
  $region49: #{patch_loss.5} parent=0
    _
  %s5 = ssub.s32 1, %s3
  %s6 = scalar_select 0, %s5, %s3
  loop: start=0, step=1, limit=4
  $region2: #{patch_loss.5} parent=0 // loop_pre_header
    _
  $region3: #{patch_loss.5} parent=0 // loop_header
    %s8 = sphi 0, %s12
    %p9 = scmp.ge.s32.totalorder %s8, 4
    %s15 = sphi 0, %s27
    %s16 = sphi 0, %s23
    %s17 = sphi 0, %s15
    %s18 = sphi 0, %s16
    %s19 = sphi 0, %s17
    %s20 = sphi 0, %s18
    %s32 = sphi 0, %s34
    %s35 = sphi 0, %s32
    %s36 = sphi 0, %s35
    %s52 = sphi 0, %s36
    %s60 = sphi 0, %s62
    %s63 = sphi 0, %s60
    %s64 = sphi 0, %s63
    %s80 = sphi 0, %s64
    %s86 = sphi 0, %s88
    %s89 = sphi 0, %s86
    %s90 = sphi 0, %s89
    %s106 = sphi 0, %s90
  $region4: #{patch_loss.5} parent=0 // loop_header_branch
    %11 = sbr.rel (%p9) target = $region8
  $region5: #{patch_loss.5} parent=0 // loop_body
    %s13 = ssub.s32 %s8, 1
    %s14 = ssub.s32 %s8, 2
    %s21 = sadd.s32 1, %s16
    %p22 = scmp.ge.s32.totalorder %s21, 1
    %s23 = scalar_select %p22, 0, %s21
    %s24 = sadd.s32 1, %s15
    %s25 = scalar_select %p22, %s24, %s15
    %p26 = scmp.ge.s32.totalorder %s25, 2
    %s27 = scalar_select %p26, 0, %s25
    %s28 = ssub.s32 %s15, %s27
    %s29 = ssub.s32 %s16, %s23
    %s30 = sor.u32 %s28, %s29
    %p31 = scmp.eq.s32.totalorder %s30, 0
    %s33 = sadd.s32 %s32, 1
    %s34 = scalar_select %p31, %s32, %s33
    %p37 = pneg %p31
    %p38 = scmp.eq.s32.totalorder %s8, 1
    %p39 = por %p37, %p38
    %p40 = scmp.ne.s32.totalorder %s32, %s35
    %p41 = scmp.eq.s32.totalorder %s8, 0
    %p42 = por %p40, %p41
    %p43 = scmp.ne.s32.totalorder %s32, %s35
    %p44 = scmp.eq.s32.totalorder %s13, 1
    %p45 = por %p43, %p44
    %p46 = scmp.ne.s32.totalorder %s35, %s36
    %p47 = scmp.eq.s32.totalorder %s13, 0
    %p48 = por %p46, %p47
    %p49 = scmp.ne.s32.totalorder %s35, %s36
    %p50 = scmp.eq.s32.totalorder %s14, 1
    %p51 = por %p49, %p50
    %p53 = scmp.ne.s32.totalorder %s36, %s52
    %p54 = scmp.eq.s32.totalorder %s14, 0
    %p55 = por %p53, %p54
    %s56 = ssub.s32 %s15, %s27
    %s57 = ssub.s32 %s16, %s23
    %s58 = sor.u32 %s56, %s57
    %p59 = scmp.eq.s32.totalorder %s58, 0
    %s61 = sadd.s32 %s60, 1
    %s62 = scalar_select %p59, %s60, %s61
    %p65 = pneg %p59
    %p66 = scmp.eq.s32.totalorder %s8, 1
    %p67 = por %p65, %p66
    %p68 = scmp.ne.s32.totalorder %s60, %s63
    %p69 = scmp.eq.s32.totalorder %s8, 0
    %p70 = por %p68, %p69
    %p71 = scmp.ne.s32.totalorder %s60, %s63
    %p72 = scmp.eq.s32.totalorder %s13, 1
    %p73 = por %p71, %p72
    %p74 = scmp.ne.s32.totalorder %s63, %s64
    %p75 = scmp.eq.s32.totalorder %s13, 0
    %p76 = por %p74, %p75
    %p77 = scmp.ne.s32.totalorder %s63, %s64
    %p78 = scmp.eq.s32.totalorder %s14, 1
    %p79 = por %p77, %p78
    %p81 = scmp.ne.s32.totalorder %s64, %s80
    %p82 = scmp.eq.s32.totalorder %s14, 0
    %p83 = por %p81, %p82
    %s84 = ssub.s32 %s15, %s27
    %p85 = scmp.eq.s32.totalorder %s84, 0
    %s87 = sadd.s32 %s86, 1
    %s88 = scalar_select %p85, %s86, %s87
    %p91 = pneg %p85
    %p92 = scmp.eq.s32.totalorder %s8, 1
    %p93 = por %p91, %p92
    %p94 = scmp.ne.s32.totalorder %s86, %s89
    %p95 = scmp.eq.s32.totalorder %s8, 0
    %p96 = por %p94, %p95
    %p97 = scmp.ne.s32.totalorder %s86, %s89
    %p98 = scmp.eq.s32.totalorder %s13, 1
    %p99 = por %p97, %p98
    %p100 = scmp.ne.s32.totalorder %s89, %s90
    %p101 = scmp.eq.s32.totalorder %s13, 0
    %p102 = por %p100, %p101
    %p103 = scmp.ne.s32.totalorder %s89, %s90
    %p104 = scmp.eq.s32.totalorder %s14, 1
    %p105 = por %p103, %p104
    %p107 = scmp.ne.s32.totalorder %s90, %s106
    %p108 = scmp.eq.s32.totalorder %s14, 0
    %p109 = por %p107, %p108
    %p110 = scmp.le.s32.totalorder 1, %s8
    %p111 = scmp.lt.s32.totalorder %s8, 3
    %p112 = pnand %p110, %p111
    %p113 = pneg %p112
    // Predicated region
    $region9: #{patch_loss.5} parent=5 // pred_check
      _
    $region10: #{patch_loss.5} parent=5 // pred_check_branch
      %115 = sbr.rel (%p112) target = $region12
    $region11: #{patch_loss.5} parent=5 // pred_region
      %s116 = ssub.s32 %s8, 1
    $region12: #{patch_loss.5} parent=5 // pred_fallthru
      _
    %p117 = scmp.lt.s32.totalorder %s8, 2
    // Predicated region
    $region13: #{patch_loss.5} parent=5 // pred_check
      %p118 = pneg %p117
    $region14: #{patch_loss.5} parent=5 // pred_check_branch
      %120 = sbr.rel (%p118) target = $region16
    $region15: #{patch_loss.5} parent=5 // pred_region
      // Predicated region
      $region17: #{patch_loss.5} parent=15 // pred_check
        %p121 = pneg %p42
      $region18: #{patch_loss.5} parent=15 // pred_check_branch
        %123 = sbr.rel (%p121) target = $region20
      $region19: #{patch_loss.5} parent=15 // pred_region
        %p124 = scmp.lt.s32.totalorder %s15, 1
        %s125 = scalar_select %p124, %s15, 1
        %p126 = scmp.lt.s32.totalorder %s16, 0
        %s127 = scalar_select %p126, %s16, 0
        %s128 = smul.addr %s125, 9
        %s129 = sadd.s32 %s127, %s128
        %s130 = scalar_lea.vmem %s0, %s129
      $region20: #{patch_loss.5} parent=15 // pred_fallthru
        _
      // Predicated region
      $region21: #{patch_loss.5} parent=15 // pred_check
        %p131 = pneg %p70
      $region22: #{patch_loss.5} parent=15 // pred_check_branch
        %133 = sbr.rel (%p131) target = $region24
      $region23: #{patch_loss.5} parent=15 // pred_region
        %p134 = scmp.lt.s32.totalorder %s15, 1
        %s135 = scalar_select %p134, %s15, 1
        %p136 = scmp.lt.s32.totalorder %s16, 0
        %s137 = scalar_select %p136, %s16, 0
        %s138 = smul.addr %s135, 9
        %s139 = sadd.s32 %s137, %s138
        %s140 = scalar_lea.vmem %s1, %s139
      $region24: #{patch_loss.5} parent=15 // pred_fallthru
        _
    $region16: #{patch_loss.5} parent=5 // pred_fallthru
      _
    %p141 = scmp.le.s32.totalorder 1, %s8
    %p142 = scmp.lt.s32.totalorder %s8, 3
    %p143 = pnand %p141, %p142
    %p144 = pneg %p143
    // Predicated region
    $region25: #{patch_loss.5} parent=5 // pred_check
      _
    $region26: #{patch_loss.5} parent=5 // pred_check_branch
      %146 = sbr.rel (%p143) target = $region28
    $region27: #{patch_loss.5} parent=5 // pred_region
      %s147 = ssub.s32 %s8, 1
      %p148 = scmp.lt.s32.totalorder %s17, 1
      %s149 = scalar_select %p148, %s17, 1
      %p150 = scmp.lt.s32.totalorder %s18, 0
      %s151 = scalar_select %p150, %s18, 0
      %s152 = smul.addr %s149, 9
      %s153 = sadd.s32 %s151, %s152
      %s154 = scalar_lea.vmem %s0, %s153
      %p155 = pneg %p48
      %p156 = pneg %p45
      %p157 = scmp.lt.s32.totalorder %s17, 1
      %s158 = scalar_select %p157, %s17, 1
      %p159 = scmp.lt.s32.totalorder %s18, 0
      %s160 = scalar_select %p159, %s18, 0
      %s161 = smul.addr %s158, 9
      %s162 = sadd.s32 %s160, %s161
      %s163 = scalar_lea.vmem %s1, %s162
      %p164 = pneg %p76
      %p165 = pneg %p73
      %p166 = pneg %p102
      %p167 = pneg %p99
      %p168 = scmp.lt.s32.totalorder %s17, 1
      %s169 = scalar_select %p168, %s17, 1
      %s170 = scalar_lea.vmem %s2, %s169
      %p171 = scmp.lt.s32.totalorder %s17, 1
      %s172 = scalar_select %p171, %s17, 1
      %p173 = scmp.lt.s32.totalorder %s18, 0
      %s174 = scalar_select %p173, %s18, 0
      %s175 = smul.addr %s172, 9
      %s176 = sadd.s32 %s174, %s175
      %s177 = scalar_lea.vmem %s0, %s176
      %p178 = scmp.lt.s32.totalorder %s17, 1
      %s179 = scalar_select %p178, %s17, 1
      %p180 = scmp.lt.s32.totalorder %s18, 0
      %s181 = scalar_select %p180, %s18, 0
      %s182 = smul.addr %s179, 9
      %s183 = sadd.s32 %s181, %s182
      %s184 = scalar_lea.vmem %s1, %s183
      %p185 = scmp.lt.s32.totalorder %s17, 1
      %s186 = scalar_select %p185, %s17, 1
      %s187 = scalar_lea.vmem %s2, %s186
      %p188 = scmp.eq.s32.totalorder %s18, 0
      // Predicated region
      $region29: #{patch_loss.5} parent=27 // pred_check
        %p189 = pneg %p188
      $region30: #{patch_loss.5} parent=27 // pred_check_branch
        %191 = sbr.rel (%p189) target = $region32
      $region31: #{patch_loss.5} parent=27 // pred_region
        %192 = vst [vmem:[#allocation2] sm:$0x1] 0.0
        %193 = vst [vmem:[#allocation3] sm:$0x1] 0.0
      $region32: #{patch_loss.5} parent=27 // pred_fallthru
        _
      %v194 = vld [vmem:[%s177] sm:$0x1]
      %v195 = vld [vmem:[%s184] sm:$0x1]
      %v196 = vmul.f32 %v194, %v194
      %v197 = vmul.f32 %v194, %v195
      %s198 = scalar_lea.vmem %s177, 1
      %v199 = vld [vmem:[%s198] sm:$0x1]
      %s200 = scalar_lea.vmem %s184, 1
      %v201 = vld [vmem:[%s200] sm:$0x1]
      %v202 = vsub.f32 %v201, %v195
      %v203 = vmul.f32 %v199, %v199
      %v204 = vadd.f32 %v196, %v203
      %v205 = vmul.f32 %v199, %v201
      %v206 = vadd.f32 %v197, %v205
      %v207 = vmul.f32 %v202, %v202
      %v208 = vadd.f32 %v207, 0.0
      %v209 = vadd.f32 %v202, 0.0
      %s210 = scalar_lea.vmem %s177, 2
      %v211 = vld [vmem:[%s210] sm:$0x1]
      %s212 = scalar_lea.vmem %s184, 2
      %v213 = vld [vmem:[%s212] sm:$0x1]
      %v214 = vsub.f32 %v213, %v195
      %v215 = vmul.f32 %v211, %v211
      %v216 = vadd.f32 %v204, %v215
      %v217 = vmul.f32 %v211, %v213
      %v218 = vadd.f32 %v206, %v217
      %v219 = vmul.f32 %v214, %v214
      %v220 = vadd.f32 %v208, %v219
      %v221 = vadd.f32 %v209, %v214
      %s222 = scalar_lea.vmem %s177, 3
      %v223 = vld [vmem:[%s222] sm:$0x1]
      %s224 = scalar_lea.vmem %s184, 3
      %v225 = vld [vmem:[%s224] sm:$0x1]
      %v226 = vsub.f32 %v225, %v195
      %v227 = vmul.f32 %v223, %v223
      %v228 = vadd.f32 %v216, %v227
      %v229 = vmul.f32 %v223, %v225
      %v230 = vadd.f32 %v218, %v229
      %v231 = vmul.f32 %v226, %v226
      %v232 = vadd.f32 %v220, %v231
      %v233 = vadd.f32 %v221, %v226
      %s234 = scalar_lea.vmem %s177, 4
      %v235 = vld [vmem:[%s234] sm:$0x1]
      %s236 = scalar_lea.vmem %s184, 4
      %v237 = vld [vmem:[%s236] sm:$0x1]
      %v238 = vsub.f32 %v237, %v195
      %v239 = vmul.f32 %v235, %v235
      %v240 = vadd.f32 %v228, %v239
      %v241 = vmul.f32 %v235, %v237
      %v242 = vadd.f32 %v230, %v241
      %v243 = vmul.f32 %v238, %v238
      %v244 = vadd.f32 %v232, %v243
      %v245 = vadd.f32 %v233, %v238
      %s246 = scalar_lea.vmem %s177, 5
      %v247 = vld [vmem:[%s246] sm:$0x1]
      %s248 = scalar_lea.vmem %s184, 5
      %v249 = vld [vmem:[%s248] sm:$0x1]
      %v250 = vsub.f32 %v249, %v195
      %v251 = vmul.f32 %v247, %v247
      %v252 = vadd.f32 %v240, %v251
      %v253 = vmul.f32 %v247, %v249
      %v254 = vadd.f32 %v242, %v253
      %v255 = vmul.f32 %v250, %v250
      %v256 = vadd.f32 %v244, %v255
      %v257 = vadd.f32 %v245, %v250
      %s258 = scalar_lea.vmem %s177, 6
      %v259 = vld [vmem:[%s258] sm:$0x1]
      %s260 = scalar_lea.vmem %s184, 6
      %v261 = vld [vmem:[%s260] sm:$0x1]
      %v262 = vsub.f32 %v261, %v195
      %v263 = vmul.f32 %v259, %v259
      %v264 = vadd.f32 %v252, %v263
      %v265 = vmul.f32 %v259, %v261
      %v266 = vadd.f32 %v254, %v265
      %v267 = vmul.f32 %v262, %v262
      %v268 = vadd.f32 %v256, %v267
      %v269 = vadd.f32 %v257, %v262
      %s270 = scalar_lea.vmem %s177, 7
      %v271 = vld [vmem:[%s270] sm:$0x1]
      %s272 = scalar_lea.vmem %s184, 7
      %v273 = vld [vmem:[%s272] sm:$0x1]
      %v274 = vsub.f32 %v273, %v195
      %v275 = vmul.f32 %v271, %v271
      %v276 = vadd.f32 %v264, %v275
      %v277 = vmul.f32 %v271, %v273
      %v278 = vadd.f32 %v266, %v277
      %v279 = vmul.f32 %v274, %v274
      %v280 = vadd.f32 %v268, %v279
      %v281 = vadd.f32 %v269, %v274
      %s282 = scalar_lea.vmem %s177, 8
      %v283 = vld [vmem:[%s282] sm:$0x1]
      %s284 = scalar_lea.vmem %s184, 8
      %v285 = vld [vmem:[%s284] sm:$0x1]
      %v286 = vsub.f32 %v285, %v195
      %v287 = vmul.f32 %v283, %v283
      %v288 = vadd.f32 %v276, %v287
      %v289 = vmul.f32 %v283, %v285
      %v290 = vadd.f32 %v278, %v289
      %v291 = vmul.f32 %v286, %v286
      %v292 = vadd.f32 %v280, %v291
      %v293 = vadd.f32 %v281, %v286
      %v294 = vmul.f32 %v293, 2.0
      %v295 = vmul.f32 %v195, 9.0
      %v296 = vadd.f32 %v294, %v295
      %v297 = vmul.f32 %v195, %v296
      %v298 = vadd.f32 %v292, %v297
      %v299 = vmax.f32 %v288, 1e-24
      %v300 = vrsqrt.pop %v299
      %v301 = vmax.f32 %v298, 1e-24
      %v302 = vrsqrt.pop %v301
      %v303 = vmul.f32 %v290, %v300
      %v304 = vmul.f32 %v303, %v302
      %v305 = vsub.f32 1.0, %v304
      %v306 = vmul.f32 %v293, %v293
      %v307 = vmul.f32 %v306, 0.11111111
      %v308 = vsub.f32 %v292, %v307
      %v309 = vmax.f32 %v308, 0.0
      %v310 = vmul.f32 %v309, 0.125
      %v311 = vrsqrt.pop %v310
      %v312 = vmul.f32 %v310, %v311
      %vm313 = vcmp.eq.f32.partialorder %v310, inf
      %v314 = vsel %vm313, %v310, %v312
      %vm315 = vcmp.eq.f32.partialorder %v310, 0.0
      %v316 = vand.u32 %v310, 2147483648
      %v317 = vsel %vm315, %v316, %v314
      %v318 = vld [vmem:[#allocation2] sm:$0x1]
      %v319 = vmul.f32 %v305, %v317
      %v320 = vadd.f32 %v318, %v319
      %321 = vst [vmem:[#allocation2] sm:$0x1] %v320
      %v322 = vld [vmem:[#allocation3] sm:$0x1]
      %v323 = vadd.f32 %v322, %v317
      %324 = vst [vmem:[#allocation3] sm:$0x1] %v323
      // Predicated region
      $region33: #{patch_loss.5} parent=27 // pred_check
        %p325 = pneg %p188
      $region34: #{patch_loss.5} parent=27 // pred_check_branch
        %327 = sbr.rel (%p325) target = $region36
      $region35: #{patch_loss.5} parent=27 // pred_region
        %v328 = vld [vmem:[#allocation2] sm:$0x1]
        %vm329 = vcmask 1040384
        %v330 = vsel %vm329, %v328, 0.0
        %331 = vadd.xlane.f32.xlu0 %v330
        %v332 = vpop.xlane.xlu0 %331
        %v333 = vrot.slane %v332, 4
        %v334 = vadd.f32 %v332, %v333
        %v335 = vrot.slane %v334, 2
        %v336 = vadd.f32 %v334, %v335
        %v337 = vrot.slane %v336, 1
        %v338 = vadd.f32 %v336, %v337
        %s339 = vtos %v338
        %v340 = vld [vmem:[#allocation3] sm:$0x1]
        %v341 = vsel %vm329, %v340, 0.0
        %342 = vadd.xlane.f32.xlu0 %v341
        %v343 = vpop.xlane.xlu0 %342
        %v344 = vrot.slane %v343, 4
        %v345 = vadd.f32 %v343, %v344
        %v346 = vrot.slane %v345, 2
        %v347 = vadd.f32 %v345, %v346
        %v348 = vrot.slane %v347, 1
        %v349 = vadd.f32 %v347, %v348
        %s350 = vtos %v349
        %s351 = sadd.f32 %s350, 1e-08
        %v352 = vstv %s351
        %v353 = vrcp.pop %v352
        %s354 = vtos %v353
        %s355 = smul.f32 %s339, %s354
        %v356 = vstv %s355
        %357 = vst [vmem:[%s187] sm:$0x1] %v356
      $region36: #{patch_loss.5} parent=27 // pred_fallthru
        _
      %p358 = scmp.lt.s32.totalorder %s17, 1
      %s359 = scalar_select %p358, %s17, 1
      %s360 = scalar_lea.vmem %s2, %s359
      // Predicated region
      $region37: #{patch_loss.5} parent=27 // pred_check
        %p361 = pneg %p99
      $region38: #{patch_loss.5} parent=27 // pred_check_branch
        %363 = sbr.rel (%p361) target = $region40
      $region39: #{patch_loss.5} parent=27 // pred_region
        _
      $region40: #{patch_loss.5} parent=27 // pred_fallthru
        _
    $region28: #{patch_loss.5} parent=5 // pred_fallthru
      _
    %p364 = scmp.le.s32.totalorder 2, %s8
    // Predicated region
    $region41: #{patch_loss.5} parent=5 // pred_check
      %p365 = pneg %p364
    $region42: #{patch_loss.5} parent=5 // pred_check_branch
      %367 = sbr.rel (%p365) target = $region44
    $region43: #{patch_loss.5} parent=5 // pred_region
      %s368 = ssub.s32 %s8, 2
      // Predicated region
      $region45: #{patch_loss.5} parent=43 // pred_check
        %p369 = pneg %p105
      $region46: #{patch_loss.5} parent=43 // pred_check_branch
        %371 = sbr.rel (%p369) target = $region48
      $region47: #{patch_loss.5} parent=43 // pred_region
        %p372 = scmp.lt.s32.totalorder %s19, 1
        %s373 = scalar_select %p372, %s19, 1
        %s374 = scalar_lea.vmem %s2, %s373
      $region48: #{patch_loss.5} parent=43 // pred_fallthru
        _
    $region44: #{patch_loss.5} parent=5 // pred_fallthru
      _
  $region6: #{patch_loss.5} parent=0 // loop_footer
    %s12 = sadd.s32 1, %s8
  $region7: #{patch_loss.5} parent=0 // loop_footer_branch
    %7 = sbr.rel target = $region3
  $region8: #{patch_loss.5} parent=0 // loop_exit
    _

// kernel: patch_loss.4
$region0: #{patch_loss.4}
  #allocation0 [shape = 'u32[]', space=smem, size = 0x4, offset = 0x4, fixed_abs, tag = 'smem constant byte address 0x4 - core index']
  #allocation1 [shape = 'u32[144,128]{1,0:T(1,128)}', space=vmem, size = 0x12000, scoped, tag = 'internal scratch']
  #allocation2 [shape = 'f32[1,128]{1,0:T(1,128)}', space=vmem, size = 0x200, scoped, tag = 'scratch operand']
  #allocation3 [shape = 'f32[1,128]{1,0:T(1,128)}', space=vmem, size = 0x200, scoped, tag = 'scratch operand']
  %s0 = inlined_call_operand.vmem [shape: f32[2,25,1,128], index: 0, kind: input, shape index: {}]
  %s1 = inlined_call_operand.vmem [shape: f32[2,25,1,128], index: 1, kind: input, shape index: {}]
  %s2 = inlined_call_operand.vmem [shape: f32[2,1,128], index: 2, kind: output, shape index: {}]
  %s3 = sld [smem:[#allocation0]]
  $region49: #{patch_loss.4} parent=0
    _
  %s5 = ssub.s32 1, %s3
  %s6 = scalar_select 0, %s5, %s3
  loop: start=0, step=1, limit=4
  $region2: #{patch_loss.4} parent=0 // loop_pre_header
    _
  $region3: #{patch_loss.4} parent=0 // loop_header
    %s8 = sphi 0, %s12
    %p9 = scmp.ge.s32.totalorder %s8, 4
    %s15 = sphi 0, %s27
    %s16 = sphi 0, %s23
    %s17 = sphi 0, %s15
    %s18 = sphi 0, %s16
    %s19 = sphi 0, %s17
    %s20 = sphi 0, %s18
    %s32 = sphi 0, %s34
    %s35 = sphi 0, %s32
    %s36 = sphi 0, %s35
    %s52 = sphi 0, %s36
    %s60 = sphi 0, %s62
    %s63 = sphi 0, %s60
    %s64 = sphi 0, %s63
    %s80 = sphi 0, %s64
    %s86 = sphi 0, %s88
    %s89 = sphi 0, %s86
    %s90 = sphi 0, %s89
    %s106 = sphi 0, %s90
  $region4: #{patch_loss.4} parent=0 // loop_header_branch
    %11 = sbr.rel (%p9) target = $region8
  $region5: #{patch_loss.4} parent=0 // loop_body
    %s13 = ssub.s32 %s8, 1
    %s14 = ssub.s32 %s8, 2
    %s21 = sadd.s32 1, %s16
    %p22 = scmp.ge.s32.totalorder %s21, 1
    %s23 = scalar_select %p22, 0, %s21
    %s24 = sadd.s32 1, %s15
    %s25 = scalar_select %p22, %s24, %s15
    %p26 = scmp.ge.s32.totalorder %s25, 2
    %s27 = scalar_select %p26, 0, %s25
    %s28 = ssub.s32 %s15, %s27
    %s29 = ssub.s32 %s16, %s23
    %s30 = sor.u32 %s28, %s29
    %p31 = scmp.eq.s32.totalorder %s30, 0
    %s33 = sadd.s32 %s32, 1
    %s34 = scalar_select %p31, %s32, %s33
    %p37 = pneg %p31
    %p38 = scmp.eq.s32.totalorder %s8, 1
    %p39 = por %p37, %p38
    %p40 = scmp.ne.s32.totalorder %s32, %s35
    %p41 = scmp.eq.s32.totalorder %s8, 0
    %p42 = por %p40, %p41
    %p43 = scmp.ne.s32.totalorder %s32, %s35
    %p44 = scmp.eq.s32.totalorder %s13, 1
    %p45 = por %p43, %p44
    %p46 = scmp.ne.s32.totalorder %s35, %s36
    %p47 = scmp.eq.s32.totalorder %s13, 0
    %p48 = por %p46, %p47
    %p49 = scmp.ne.s32.totalorder %s35, %s36
    %p50 = scmp.eq.s32.totalorder %s14, 1
    %p51 = por %p49, %p50
    %p53 = scmp.ne.s32.totalorder %s36, %s52
    %p54 = scmp.eq.s32.totalorder %s14, 0
    %p55 = por %p53, %p54
    %s56 = ssub.s32 %s15, %s27
    %s57 = ssub.s32 %s16, %s23
    %s58 = sor.u32 %s56, %s57
    %p59 = scmp.eq.s32.totalorder %s58, 0
    %s61 = sadd.s32 %s60, 1
    %s62 = scalar_select %p59, %s60, %s61
    %p65 = pneg %p59
    %p66 = scmp.eq.s32.totalorder %s8, 1
    %p67 = por %p65, %p66
    %p68 = scmp.ne.s32.totalorder %s60, %s63
    %p69 = scmp.eq.s32.totalorder %s8, 0
    %p70 = por %p68, %p69
    %p71 = scmp.ne.s32.totalorder %s60, %s63
    %p72 = scmp.eq.s32.totalorder %s13, 1
    %p73 = por %p71, %p72
    %p74 = scmp.ne.s32.totalorder %s63, %s64
    %p75 = scmp.eq.s32.totalorder %s13, 0
    %p76 = por %p74, %p75
    %p77 = scmp.ne.s32.totalorder %s63, %s64
    %p78 = scmp.eq.s32.totalorder %s14, 1
    %p79 = por %p77, %p78
    %p81 = scmp.ne.s32.totalorder %s64, %s80
    %p82 = scmp.eq.s32.totalorder %s14, 0
    %p83 = por %p81, %p82
    %s84 = ssub.s32 %s15, %s27
    %p85 = scmp.eq.s32.totalorder %s84, 0
    %s87 = sadd.s32 %s86, 1
    %s88 = scalar_select %p85, %s86, %s87
    %p91 = pneg %p85
    %p92 = scmp.eq.s32.totalorder %s8, 1
    %p93 = por %p91, %p92
    %p94 = scmp.ne.s32.totalorder %s86, %s89
    %p95 = scmp.eq.s32.totalorder %s8, 0
    %p96 = por %p94, %p95
    %p97 = scmp.ne.s32.totalorder %s86, %s89
    %p98 = scmp.eq.s32.totalorder %s13, 1
    %p99 = por %p97, %p98
    %p100 = scmp.ne.s32.totalorder %s89, %s90
    %p101 = scmp.eq.s32.totalorder %s13, 0
    %p102 = por %p100, %p101
    %p103 = scmp.ne.s32.totalorder %s89, %s90
    %p104 = scmp.eq.s32.totalorder %s14, 1
    %p105 = por %p103, %p104
    %p107 = scmp.ne.s32.totalorder %s90, %s106
    %p108 = scmp.eq.s32.totalorder %s14, 0
    %p109 = por %p107, %p108
    %p110 = scmp.le.s32.totalorder 1, %s8
    %p111 = scmp.lt.s32.totalorder %s8, 3
    %p112 = pnand %p110, %p111
    %p113 = pneg %p112
    // Predicated region
    $region9: #{patch_loss.4} parent=5 // pred_check
      _
    $region10: #{patch_loss.4} parent=5 // pred_check_branch
      %115 = sbr.rel (%p112) target = $region12
    $region11: #{patch_loss.4} parent=5 // pred_region
      %s116 = ssub.s32 %s8, 1
    $region12: #{patch_loss.4} parent=5 // pred_fallthru
      _
    %p117 = scmp.lt.s32.totalorder %s8, 2
    // Predicated region
    $region13: #{patch_loss.4} parent=5 // pred_check
      %p118 = pneg %p117
    $region14: #{patch_loss.4} parent=5 // pred_check_branch
      %120 = sbr.rel (%p118) target = $region16
    $region15: #{patch_loss.4} parent=5 // pred_region
      // Predicated region
      $region17: #{patch_loss.4} parent=15 // pred_check
        %p121 = pneg %p42
      $region18: #{patch_loss.4} parent=15 // pred_check_branch
        %123 = sbr.rel (%p121) target = $region20
      $region19: #{patch_loss.4} parent=15 // pred_region
        %p124 = scmp.lt.s32.totalorder %s15, 1
        %s125 = scalar_select %p124, %s15, 1
        %p126 = scmp.lt.s32.totalorder %s16, 0
        %s127 = scalar_select %p126, %s16, 0
        %s128 = smul.addr %s125, 25
        %s129 = sadd.s32 %s127, %s128
        %s130 = scalar_lea.vmem %s0, %s129
      $region20: #{patch_loss.4} parent=15 // pred_fallthru
        _
      // Predicated region
      $region21: #{patch_loss.4} parent=15 // pred_check
        %p131 = pneg %p70
      $region22: #{patch_loss.4} parent=15 // pred_check_branch
        %133 = sbr.rel (%p131) target = $region24
      $region23: #{patch_loss.4} parent=15 // pred_region
        %p134 = scmp.lt.s32.totalorder %s15, 1
        %s135 = scalar_select %p134, %s15, 1
        %p136 = scmp.lt.s32.totalorder %s16, 0
        %s137 = scalar_select %p136, %s16, 0
        %s138 = smul.addr %s135, 25
        %s139 = sadd.s32 %s137, %s138
        %s140 = scalar_lea.vmem %s1, %s139
      $region24: #{patch_loss.4} parent=15 // pred_fallthru
        _
    $region16: #{patch_loss.4} parent=5 // pred_fallthru
      _
    %p141 = scmp.le.s32.totalorder 1, %s8
    %p142 = scmp.lt.s32.totalorder %s8, 3
    %p143 = pnand %p141, %p142
    %p144 = pneg %p143
    // Predicated region
    $region25: #{patch_loss.4} parent=5 // pred_check
      _
    $region26: #{patch_loss.4} parent=5 // pred_check_branch
      %146 = sbr.rel (%p143) target = $region28
    $region27: #{patch_loss.4} parent=5 // pred_region
      %s147 = ssub.s32 %s8, 1
      %p148 = scmp.lt.s32.totalorder %s17, 1
      %s149 = scalar_select %p148, %s17, 1
      %p150 = scmp.lt.s32.totalorder %s18, 0
      %s151 = scalar_select %p150, %s18, 0
      %s152 = smul.addr %s149, 25
      %s153 = sadd.s32 %s151, %s152
      %s154 = scalar_lea.vmem %s0, %s153
      %p155 = pneg %p48
      %p156 = pneg %p45
      %p157 = scmp.lt.s32.totalorder %s17, 1
      %s158 = scalar_select %p157, %s17, 1
      %p159 = scmp.lt.s32.totalorder %s18, 0
      %s160 = scalar_select %p159, %s18, 0
      %s161 = smul.addr %s158, 25
      %s162 = sadd.s32 %s160, %s161
      %s163 = scalar_lea.vmem %s1, %s162
      %p164 = pneg %p76
      %p165 = pneg %p73
      %p166 = pneg %p102
      %p167 = pneg %p99
      %p168 = scmp.lt.s32.totalorder %s17, 1
      %s169 = scalar_select %p168, %s17, 1
      %s170 = scalar_lea.vmem %s2, %s169
      %p171 = scmp.lt.s32.totalorder %s17, 1
      %s172 = scalar_select %p171, %s17, 1
      %p173 = scmp.lt.s32.totalorder %s18, 0
      %s174 = scalar_select %p173, %s18, 0
      %s175 = smul.addr %s172, 25
      %s176 = sadd.s32 %s174, %s175
      %s177 = scalar_lea.vmem %s0, %s176
      %p178 = scmp.lt.s32.totalorder %s17, 1
      %s179 = scalar_select %p178, %s17, 1
      %p180 = scmp.lt.s32.totalorder %s18, 0
      %s181 = scalar_select %p180, %s18, 0
      %s182 = smul.addr %s179, 25
      %s183 = sadd.s32 %s181, %s182
      %s184 = scalar_lea.vmem %s1, %s183
      %p185 = scmp.lt.s32.totalorder %s17, 1
      %s186 = scalar_select %p185, %s17, 1
      %s187 = scalar_lea.vmem %s2, %s186
      %p188 = scmp.eq.s32.totalorder %s18, 0
      // Predicated region
      $region29: #{patch_loss.4} parent=27 // pred_check
        %p189 = pneg %p188
      $region30: #{patch_loss.4} parent=27 // pred_check_branch
        %191 = sbr.rel (%p189) target = $region32
      $region31: #{patch_loss.4} parent=27 // pred_region
        %192 = vst [vmem:[#allocation2] sm:$0x1] 0.0
        %193 = vst [vmem:[#allocation3] sm:$0x1] 0.0
      $region32: #{patch_loss.4} parent=27 // pred_fallthru
        _
      %v194 = vld [vmem:[%s177] sm:$0x1]
      %v195 = vld [vmem:[%s184] sm:$0x1]
      %v196 = vmul.f32 %v194, %v194
      %v197 = vmul.f32 %v194, %v195
      %s198 = scalar_lea.vmem %s177, 1
      %v199 = vld [vmem:[%s198] sm:$0x1]
      %s200 = scalar_lea.vmem %s184, 1
      %v201 = vld [vmem:[%s200] sm:$0x1]
      %v202 = vsub.f32 %v201, %v195
      %v203 = vmul.f32 %v199, %v199
      %v204 = vadd.f32 %v196, %v203
      %v205 = vmul.f32 %v199, %v201
      %v206 = vadd.f32 %v197, %v205
      %v207 = vmul.f32 %v202, %v202
      %v208 = vadd.f32 %v207, 0.0
      %v209 = vadd.f32 %v202, 0.0
      %s210 = scalar_lea.vmem %s177, 2
      %v211 = vld [vmem:[%s210] sm:$0x1]
      %s212 = scalar_lea.vmem %s184, 2
      %v213 = vld [vmem:[%s212] sm:$0x1]
      %v214 = vsub.f32 %v213, %v195
      %v215 = vmul.f32 %v211, %v211
      %v216 = vadd.f32 %v204, %v215
      %v217 = vmul.f32 %v211, %v213
      %v218 = vadd.f32 %v206, %v217
      %v219 = vmul.f32 %v214, %v214
      %v220 = vadd.f32 %v208, %v219
      %v221 = vadd.f32 %v209, %v214
      %s222 = scalar_lea.vmem %s177, 3
      %v223 = vld [vmem:[%s222] sm:$0x1]
      %s224 = scalar_lea.vmem %s184, 3
      %v225 = vld [vmem:[%s224] sm:$0x1]
      %v226 = vsub.f32 %v225, %v195
      %v227 = vmul.f32 %v223, %v223
      %v228 = vadd.f32 %v216, %v227
      %v229 = vmul.f32 %v223, %v225
      %v230 = vadd.f32 %v218, %v229
      %v231 = vmul.f32 %v226, %v226
      %v232 = vadd.f32 %v220, %v231
      %v233 = vadd.f32 %v221, %v226
      %s234 = scalar_lea.vmem %s177, 4
      %v235 = vld [vmem:[%s234] sm:$0x1]
      %s236 = scalar_lea.vmem %s184, 4
      %v237 = vld [vmem:[%s236] sm:$0x1]
      %v238 = vsub.f32 %v237, %v195
      %v239 = vmul.f32 %v235, %v235
      %v240 = vadd.f32 %v228, %v239
      %v241 = vmul.f32 %v235, %v237
      %v242 = vadd.f32 %v230, %v241
      %v243 = vmul.f32 %v238, %v238
      %v244 = vadd.f32 %v232, %v243
      %v245 = vadd.f32 %v233, %v238
      %s246 = scalar_lea.vmem %s177, 5
      %v247 = vld [vmem:[%s246] sm:$0x1]
      %s248 = scalar_lea.vmem %s184, 5
      %v249 = vld [vmem:[%s248] sm:$0x1]
      %v250 = vsub.f32 %v249, %v195
      %v251 = vmul.f32 %v247, %v247
      %v252 = vadd.f32 %v240, %v251
      %v253 = vmul.f32 %v247, %v249
      %v254 = vadd.f32 %v242, %v253
      %v255 = vmul.f32 %v250, %v250
      %v256 = vadd.f32 %v244, %v255
      %v257 = vadd.f32 %v245, %v250
      %s258 = scalar_lea.vmem %s177, 6
      %v259 = vld [vmem:[%s258] sm:$0x1]
      %s260 = scalar_lea.vmem %s184, 6
      %v261 = vld [vmem:[%s260] sm:$0x1]
      %v262 = vsub.f32 %v261, %v195
      %v263 = vmul.f32 %v259, %v259
      %v264 = vadd.f32 %v252, %v263
      %v265 = vmul.f32 %v259, %v261
      %v266 = vadd.f32 %v254, %v265
      %v267 = vmul.f32 %v262, %v262
      %v268 = vadd.f32 %v256, %v267
      %v269 = vadd.f32 %v257, %v262
      %s270 = scalar_lea.vmem %s177, 7
      %v271 = vld [vmem:[%s270] sm:$0x1]
      %s272 = scalar_lea.vmem %s184, 7
      %v273 = vld [vmem:[%s272] sm:$0x1]
      %v274 = vsub.f32 %v273, %v195
      %v275 = vmul.f32 %v271, %v271
      %v276 = vadd.f32 %v264, %v275
      %v277 = vmul.f32 %v271, %v273
      %v278 = vadd.f32 %v266, %v277
      %v279 = vmul.f32 %v274, %v274
      %v280 = vadd.f32 %v268, %v279
      %v281 = vadd.f32 %v269, %v274
      %s282 = scalar_lea.vmem %s177, 8
      %v283 = vld [vmem:[%s282] sm:$0x1]
      %s284 = scalar_lea.vmem %s184, 8
      %v285 = vld [vmem:[%s284] sm:$0x1]
      %v286 = vsub.f32 %v285, %v195
      %v287 = vmul.f32 %v283, %v283
      %v288 = vadd.f32 %v276, %v287
      %v289 = vmul.f32 %v283, %v285
      %v290 = vadd.f32 %v278, %v289
      %v291 = vmul.f32 %v286, %v286
      %v292 = vadd.f32 %v280, %v291
      %v293 = vadd.f32 %v281, %v286
      %s294 = scalar_lea.vmem %s177, 9
      %v295 = vld [vmem:[%s294] sm:$0x1]
      %s296 = scalar_lea.vmem %s184, 9
      %v297 = vld [vmem:[%s296] sm:$0x1]
      %v298 = vsub.f32 %v297, %v195
      %v299 = vmul.f32 %v295, %v295
      %v300 = vadd.f32 %v288, %v299
      %v301 = vmul.f32 %v295, %v297
      %v302 = vadd.f32 %v290, %v301
      %v303 = vmul.f32 %v298, %v298
      %v304 = vadd.f32 %v292, %v303
      %v305 = vadd.f32 %v293, %v298
      %s306 = scalar_lea.vmem %s177, 10
      %v307 = vld [vmem:[%s306] sm:$0x1]
      %s308 = scalar_lea.vmem %s184, 10
      %v309 = vld [vmem:[%s308] sm:$0x1]
      %v310 = vsub.f32 %v309, %v195
      %v311 = vmul.f32 %v307, %v307
      %v312 = vadd.f32 %v300, %v311
      %v313 = vmul.f32 %v307, %v309
      %v314 = vadd.f32 %v302, %v313
      %v315 = vmul.f32 %v310, %v310
      %v316 = vadd.f32 %v304, %v315
      %v317 = vadd.f32 %v305, %v310
      %s318 = scalar_lea.vmem %s177, 11
      %v319 = vld [vmem:[%s318] sm:$0x1]
      %s320 = scalar_lea.vmem %s184, 11
      %v321 = vld [vmem:[%s320] sm:$0x1]
      %v322 = vsub.f32 %v321, %v195
      %v323 = vmul.f32 %v319, %v319
      %v324 = vadd.f32 %v312, %v323
      %v325 = vmul.f32 %v319, %v321
      %v326 = vadd.f32 %v314, %v325
      %v327 = vmul.f32 %v322, %v322
      %v328 = vadd.f32 %v316, %v327
      %v329 = vadd.f32 %v317, %v322
      %s330 = scalar_lea.vmem %s177, 12
      %v331 = vld [vmem:[%s330] sm:$0x1]
      %s332 = scalar_lea.vmem %s184, 12
      %v333 = vld [vmem:[%s332] sm:$0x1]
      %v334 = vsub.f32 %v333, %v195
      %v335 = vmul.f32 %v331, %v331
      %v336 = vadd.f32 %v324, %v335
      %v337 = vmul.f32 %v331, %v333
      %v338 = vadd.f32 %v326, %v337
      %v339 = vmul.f32 %v334, %v334
      %v340 = vadd.f32 %v328, %v339
      %v341 = vadd.f32 %v329, %v334
      %s342 = scalar_lea.vmem %s177, 13
      %v343 = vld [vmem:[%s342] sm:$0x1]
      %s344 = scalar_lea.vmem %s184, 13
      %v345 = vld [vmem:[%s344] sm:$0x1]
      %v346 = vsub.f32 %v345, %v195
      %v347 = vmul.f32 %v343, %v343
      %v348 = vadd.f32 %v336, %v347
      %v349 = vmul.f32 %v343, %v345
      %v350 = vadd.f32 %v338, %v349
      %v351 = vmul.f32 %v346, %v346
      %v352 = vadd.f32 %v340, %v351
      %v353 = vadd.f32 %v341, %v346
      %s354 = scalar_lea.vmem %s177, 14
      %v355 = vld [vmem:[%s354] sm:$0x1]
      %s356 = scalar_lea.vmem %s184, 14
      %v357 = vld [vmem:[%s356] sm:$0x1]
      %v358 = vsub.f32 %v357, %v195
      %v359 = vmul.f32 %v355, %v355
      %v360 = vadd.f32 %v348, %v359
      %v361 = vmul.f32 %v355, %v357
      %v362 = vadd.f32 %v350, %v361
      %v363 = vmul.f32 %v358, %v358
      %v364 = vadd.f32 %v352, %v363
      %v365 = vadd.f32 %v353, %v358
      %s366 = scalar_lea.vmem %s177, 15
      %v367 = vld [vmem:[%s366] sm:$0x1]
      %s368 = scalar_lea.vmem %s184, 15
      %v369 = vld [vmem:[%s368] sm:$0x1]
      %v370 = vsub.f32 %v369, %v195
      %v371 = vmul.f32 %v367, %v367
      %v372 = vadd.f32 %v360, %v371
      %v373 = vmul.f32 %v367, %v369
      %v374 = vadd.f32 %v362, %v373
      %v375 = vmul.f32 %v370, %v370
      %v376 = vadd.f32 %v364, %v375
      %v377 = vadd.f32 %v365, %v370
      %s378 = scalar_lea.vmem %s177, 16
      %v379 = vld [vmem:[%s378] sm:$0x1]
      %s380 = scalar_lea.vmem %s184, 16
      %v381 = vld [vmem:[%s380] sm:$0x1]
      %v382 = vsub.f32 %v381, %v195
      %v383 = vmul.f32 %v379, %v379
      %v384 = vadd.f32 %v372, %v383
      %v385 = vmul.f32 %v379, %v381
      %v386 = vadd.f32 %v374, %v385
      %v387 = vmul.f32 %v382, %v382
      %v388 = vadd.f32 %v376, %v387
      %v389 = vadd.f32 %v377, %v382
      %s390 = scalar_lea.vmem %s177, 17
      %v391 = vld [vmem:[%s390] sm:$0x1]
      %s392 = scalar_lea.vmem %s184, 17
      %v393 = vld [vmem:[%s392] sm:$0x1]
      %v394 = vsub.f32 %v393, %v195
      %v395 = vmul.f32 %v391, %v391
      %v396 = vadd.f32 %v384, %v395
      %v397 = vmul.f32 %v391, %v393
      %v398 = vadd.f32 %v386, %v397
      %v399 = vmul.f32 %v394, %v394
      %v400 = vadd.f32 %v388, %v399
      %v401 = vadd.f32 %v389, %v394
      %s402 = scalar_lea.vmem %s177, 18
      %v403 = vld [vmem:[%s402] sm:$0x1]
      %s404 = scalar_lea.vmem %s184, 18
      %v405 = vld [vmem:[%s404] sm:$0x1]
      %v406 = vsub.f32 %v405, %v195
      %v407 = vmul.f32 %v403, %v403
      %v408 = vadd.f32 %v396, %v407
      %v409 = vmul.f32 %v403, %v405
      %v410 = vadd.f32 %v398, %v409
      %v411 = vmul.f32 %v406, %v406
      %v412 = vadd.f32 %v400, %v411
      %v413 = vadd.f32 %v401, %v406
      %s414 = scalar_lea.vmem %s177, 19
      %v415 = vld [vmem:[%s414] sm:$0x1]
      %s416 = scalar_lea.vmem %s184, 19
      %v417 = vld [vmem:[%s416] sm:$0x1]
      %v418 = vsub.f32 %v417, %v195
      %v419 = vmul.f32 %v415, %v415
      %v420 = vadd.f32 %v408, %v419
      %v421 = vmul.f32 %v415, %v417
      %v422 = vadd.f32 %v410, %v421
      %v423 = vmul.f32 %v418, %v418
      %v424 = vadd.f32 %v412, %v423
      %v425 = vadd.f32 %v413, %v418
      %s426 = scalar_lea.vmem %s177, 20
      %v427 = vld [vmem:[%s426] sm:$0x1]
      %s428 = scalar_lea.vmem %s184, 20
      %v429 = vld [vmem:[%s428] sm:$0x1]
      %v430 = vsub.f32 %v429, %v195
      %v431 = vmul.f32 %v427, %v427
      %v432 = vadd.f32 %v420, %v431
      %v433 = vmul.f32 %v427, %v429
      %v434 = vadd.f32 %v422, %v433
      %v435 = vmul.f32 %v430, %v430
      %v436 = vadd.f32 %v424, %v435
      %v437 = vadd.f32 %v425, %v430
      %s438 = scalar_lea.vmem %s177, 21
      %v439 = vld [vmem:[%s438] sm:$0x1]
      %s440 = scalar_lea.vmem %s184, 21
      %v441 = vld [vmem:[%s440] sm:$0x1]
      %v442 = vsub.f32 %v441, %v195
      %v443 = vmul.f32 %v439, %v439
      %v444 = vadd.f32 %v432, %v443
      %v445 = vmul.f32 %v439, %v441
      %v446 = vadd.f32 %v434, %v445
      %v447 = vmul.f32 %v442, %v442
      %v448 = vadd.f32 %v436, %v447
      %v449 = vadd.f32 %v437, %v442
      %s450 = scalar_lea.vmem %s177, 22
      %v451 = vld [vmem:[%s450] sm:$0x1]
      %s452 = scalar_lea.vmem %s184, 22
      %v453 = vld [vmem:[%s452] sm:$0x1]
      %v454 = vsub.f32 %v453, %v195
      %v455 = vmul.f32 %v451, %v451
      %v456 = vadd.f32 %v444, %v455
      %v457 = vmul.f32 %v451, %v453
      %v458 = vadd.f32 %v446, %v457
      %v459 = vmul.f32 %v454, %v454
      %v460 = vadd.f32 %v448, %v459
      %v461 = vadd.f32 %v449, %v454
      %s462 = scalar_lea.vmem %s177, 23
      %v463 = vld [vmem:[%s462] sm:$0x1]
      %s464 = scalar_lea.vmem %s184, 23
      %v465 = vld [vmem:[%s464] sm:$0x1]
      %v466 = vsub.f32 %v465, %v195
      %v467 = vmul.f32 %v463, %v463
      %v468 = vadd.f32 %v456, %v467
      %v469 = vmul.f32 %v463, %v465
      %v470 = vadd.f32 %v458, %v469
      %v471 = vmul.f32 %v466, %v466
      %v472 = vadd.f32 %v460, %v471
      %v473 = vadd.f32 %v461, %v466
      %s474 = scalar_lea.vmem %s177, 24
      %v475 = vld [vmem:[%s474] sm:$0x1]
      %s476 = scalar_lea.vmem %s184, 24
      %v477 = vld [vmem:[%s476] sm:$0x1]
      %v478 = vsub.f32 %v477, %v195
      %v479 = vmul.f32 %v475, %v475
      %v480 = vadd.f32 %v468, %v479
      %v481 = vmul.f32 %v475, %v477
      %v482 = vadd.f32 %v470, %v481
      %v483 = vmul.f32 %v478, %v478
      %v484 = vadd.f32 %v472, %v483
      %v485 = vadd.f32 %v473, %v478
      %v486 = vmul.f32 %v485, 2.0
      %v487 = vmul.f32 %v195, 25.0
      %v488 = vadd.f32 %v486, %v487
      %v489 = vmul.f32 %v195, %v488
      %v490 = vadd.f32 %v484, %v489
      %v491 = vmax.f32 %v480, 1e-24
      %v492 = vrsqrt.pop %v491
      %v493 = vmax.f32 %v490, 1e-24
      %v494 = vrsqrt.pop %v493
      %v495 = vmul.f32 %v482, %v492
      %v496 = vmul.f32 %v495, %v494
      %v497 = vsub.f32 1.0, %v496
      %v498 = vmul.f32 %v485, %v485
      %v499 = vmul.f32 %v498, 0.04
      %v500 = vsub.f32 %v484, %v499
      %v501 = vmax.f32 %v500, 0.0
      %v502 = vmul.f32 %v501, 0.041666668
      %v503 = vrsqrt.pop %v502
      %v504 = vmul.f32 %v502, %v503
      %vm505 = vcmp.eq.f32.partialorder %v502, inf
      %v506 = vsel %vm505, %v502, %v504
      %vm507 = vcmp.eq.f32.partialorder %v502, 0.0
      %v508 = vand.u32 %v502, 2147483648
      %v509 = vsel %vm507, %v508, %v506
      %v510 = vld [vmem:[#allocation2] sm:$0x1]
      %v511 = vmul.f32 %v497, %v509
      %v512 = vadd.f32 %v510, %v511
      %513 = vst [vmem:[#allocation2] sm:$0x1] %v512
      %v514 = vld [vmem:[#allocation3] sm:$0x1]
      %v515 = vadd.f32 %v514, %v509
      %516 = vst [vmem:[#allocation3] sm:$0x1] %v515
      // Predicated region
      $region33: #{patch_loss.4} parent=27 // pred_check
        %p517 = pneg %p188
      $region34: #{patch_loss.4} parent=27 // pred_check_branch
        %519 = sbr.rel (%p517) target = $region36
      $region35: #{patch_loss.4} parent=27 // pred_region
        %v520 = vld [vmem:[#allocation2] sm:$0x1]
        %vm521 = vcmask 1040384
        %v522 = vsel %vm521, %v520, 0.0
        %523 = vadd.xlane.f32.xlu0 %v522
        %v524 = vpop.xlane.xlu0 %523
        %v525 = vrot.slane %v524, 4
        %v526 = vadd.f32 %v524, %v525
        %v527 = vrot.slane %v526, 2
        %v528 = vadd.f32 %v526, %v527
        %v529 = vrot.slane %v528, 1
        %v530 = vadd.f32 %v528, %v529
        %s531 = vtos %v530
        %v532 = vld [vmem:[#allocation3] sm:$0x1]
        %v533 = vsel %vm521, %v532, 0.0
        %534 = vadd.xlane.f32.xlu0 %v533
        %v535 = vpop.xlane.xlu0 %534
        %v536 = vrot.slane %v535, 4
        %v537 = vadd.f32 %v535, %v536
        %v538 = vrot.slane %v537, 2
        %v539 = vadd.f32 %v537, %v538
        %v540 = vrot.slane %v539, 1
        %v541 = vadd.f32 %v539, %v540
        %s542 = vtos %v541
        %s543 = sadd.f32 %s542, 1e-08
        %v544 = vstv %s543
        %v545 = vrcp.pop %v544
        %s546 = vtos %v545
        %s547 = smul.f32 %s531, %s546
        %v548 = vstv %s547
        %549 = vst [vmem:[%s187] sm:$0x1] %v548
      $region36: #{patch_loss.4} parent=27 // pred_fallthru
        _
      %p550 = scmp.lt.s32.totalorder %s17, 1
      %s551 = scalar_select %p550, %s17, 1
      %s552 = scalar_lea.vmem %s2, %s551
      // Predicated region
      $region37: #{patch_loss.4} parent=27 // pred_check
        %p553 = pneg %p99
      $region38: #{patch_loss.4} parent=27 // pred_check_branch
        %555 = sbr.rel (%p553) target = $region40
      $region39: #{patch_loss.4} parent=27 // pred_region
        _
      $region40: #{patch_loss.4} parent=27 // pred_fallthru
        _
    $region28: #{patch_loss.4} parent=5 // pred_fallthru
      _
    %p556 = scmp.le.s32.totalorder 2, %s8
    // Predicated region
    $region41: #{patch_loss.4} parent=5 // pred_check
      %p557 = pneg %p556
    $region42: #{patch_loss.4} parent=5 // pred_check_branch
      %559 = sbr.rel (%p557) target = $region44
    $region43: #{patch_loss.4} parent=5 // pred_region
      %s560 = ssub.s32 %s8, 2
      // Predicated region
      $region45: #{patch_loss.4} parent=43 // pred_check
        %p561 = pneg %p105
      $region46: #{patch_loss.4} parent=43 // pred_check_branch
        %563 = sbr.rel (%p561) target = $region48
      $region47: #{patch_loss.4} parent=43 // pred_region
        %p564 = scmp.lt.s32.totalorder %s19, 1
        %s565 = scalar_select %p564, %s19, 1
        %s566 = scalar_lea.vmem %s2, %s565
      $region48: #{patch_loss.4} parent=43 // pred_fallthru
        _
    $region44: #{patch_loss.4} parent=5 // pred_fallthru
      _
  $region6: #{patch_loss.4} parent=0 // loop_footer
    %s12 = sadd.s32 1, %s8
  $region7: #{patch_loss.4} parent=0 // loop_footer_branch
    %7 = sbr.rel target = $region3
  $region8: #{patch_loss.4} parent=0 // loop_exit
    _

</llo_original>
